<compile_context>
chip_gen: v7x
topology: tpu7x:2x2x1
jax: 0.10.0
libtpu: 0.0.40
codegen_flags: <defaults>
</compile_context>

<pallas_src>
import functools

import jax
import jax.numpy as jnp
from jax.experimental import pallas as pl
from jax.experimental.pallas import tpu as pltpu


def _round_up(x, m):
    return ((x + m - 1) // m) * m


# --------------------------------- kernels ---------------------------------- #

def review_encoder_kernel(x_ref, g_ref, w_ref, b_ref, out_ref, *, tile_n, out_len):
    """Fused im2col-conv + ReLU + id-attention + softmax + weighted pooling.

    x_ref  : (1, tile_n*out_len, K*wvd)  bf16   im2col activation slab
    g_ref  : (1, tile_n, 1, Ck)          f32    hoisted per-review id-attention query
    w_ref  : (1, K*wvd, Ck)              bf16   im2col conv weight
    b_ref  : (1, 1, Ck)                  f32    conv bias
    out_ref: (1, tile_n, 1, Ck)          f32
    """
    ck = out_ref.shape[-1]
    # Conv1d over tile_n reviews as a single lane-dense MXU matmul (bf16 in, f32 acc).
    c = jnp.dot(x_ref[0], w_ref[0], preferred_element_type=jnp.float32)
    c = jnp.maximum(c + b_ref[0], 0.0)
    # TODO(synk): nn.Dropout(p=1.0) is treated as identity (eval/inference mode).
    c3 = c.reshape(tile_n, out_len, ck)                       # (n, l, k)
    g3 = g_ref[0]                                             # (n, 1, k)
    # Attention scores per position, softmax along the lane (position) dim.
    s = jnp.einsum("nqk,nlk->nql", g3, c3, preferred_element_type=jnp.float32)
    s = s - jnp.max(s, axis=-1, keepdims=True)
    p = jnp.exp(s)
    alpha = p * pl.reciprocal(jnp.sum(p, axis=-1, keepdims=True), approx=True)
    out_ref[...] = jnp.einsum("nql,nlk->nqk", alpha, c3,
                              preferred_element_type=jnp.float32)[None]


def ui_encoder_kernel(feat_ref, e_ref, out_ref):
    """Id-attention over the review axis for the whole batch in one grid step.

    feat_ref: (1, B, R, Ck) f32, e_ref: (1, B, 1, Ck) f32, out_ref: (1, B, 1, Ck) f32
    """
    f = feat_ref[0]
    e = e_ref[0]
    s = jnp.einsum("bqk,brk->bqr", e, f, preferred_element_type=jnp.float32)
    s = s - jnp.max(s, axis=-1, keepdims=True)
    p = jnp.exp(s)
    beta = p * pl.reciprocal(jnp.sum(p, axis=-1, keepdims=True), approx=True)
    out_ref[...] = jnp.einsum("bqr,brk->bqk", beta, f,
                              preferred_element_type=jnp.float32)[None]


# ----------------------------- pallas wrappers ------------------------------ #

def review_encoder_call(x_col, g, w_col, b_row, *, tile_n=128):
    """x_col: (S, NB, out_len, KW) bf16, g: (S, NB, Ck) f32,
    w_col: (S, KW, Ck) bf16, b_row: (S, 1, Ck) f32   ->   (S, NB, Ck) f32."""
    S, NB, out_len, KW = x_col.shape
    Ck = w_col.shape[-1]
    # As many reviews per grid step as practical (sublane-aligned).
    # NOTE: for realistic NARRE sizes, budget VMEM per generation (v7x: 64 MiB
    # physical / 32 MiB scoped default) and shrink tile_n (or raise vmem_limit_bytes).
    tile_n = max(8, min(tile_n, _round_up(NB, 8)))
    tile_n = _round_up(tile_n, 8)
    NBp = _round_up(NB, tile_n)
    if NBp != NB:
        x_col = jnp.pad(x_col, ((0, 0), (0, NBp - NB), (0, 0), (0, 0)))
        g = jnp.pad(g, ((0, 0), (0, NBp - NB), (0, 0)))
    x_flat = x_col.reshape(S, NBp * out_len, KW)
    g4 = g[:, :, None, :]                                     # (S, NBp, 1, Ck)
    n_tiles = NBp // tile_n
    kern = functools.partial(review_encoder_kernel, tile_n=tile_n, out_len=out_len)
    out = pl.pallas_call(
        kern,
        out_shape=jax.ShapeDtypeStruct((S, NBp, 1, Ck), jnp.float32),
        grid=(S, n_tiles),
        in_specs=[
            pl.BlockSpec((1, tile_n * out_len, KW), lambda s, t: (s, t, 0)),
            pl.BlockSpec((1, tile_n, 1, Ck), lambda s, t: (s, t, 0, 0)),
            pl.BlockSpec((1, KW, Ck), lambda s, t: (s, 0, 0)),
            pl.BlockSpec((1, 1, Ck), lambda s, t: (s, 0, 0)),
        ],
        out_specs=pl.BlockSpec((1, tile_n, 1, Ck), lambda s, t: (s, t, 0, 0)),
        compiler_params=pltpu.CompilerParams(
            dimension_semantics=("parallel", "parallel")),
    )(x_flat, g4, w_col, b_row)
    return out[:, :NB, 0, :]                                  # (S, NB, Ck)


def ui_encoder_call(feat, e):
    """feat: (S, B, R, Ck) f32, e: (S, B, Ck) f32  ->  (S, B, Ck) f32."""
    S, B, R, Ck = feat.shape
    e4 = e[:, :, None, :]
    out = pl.pallas_call(
        ui_encoder_kernel,
        out_shape=jax.ShapeDtypeStruct((S, B, 1, Ck), jnp.float32),
        grid=(S,),
        in_specs=[
            pl.BlockSpec((1, B, R, Ck), lambda s: (s, 0, 0, 0)),
            pl.BlockSpec((1, B, 1, Ck), lambda s: (s, 0, 0, 0)),
        ],
        out_specs=pl.BlockSpec((1, B, 1, Ck), lambda s: (s, 0, 0, 0)),
        compiler_params=pltpu.CompilerParams(dimension_semantics=("parallel",)),
    )(feat, e4)
    return out[:, :, 0, :]


# ------------------------------- full forward ------------------------------- #

def pallas_forward(params, u_text, i_text, u_ids, i_ids, *, review_size, conv_length,
                   tile_n=128):
    B = u_ids.shape[0]
    R = review_size
    NB = B * R
    K = conv_length
    pad = (K - 1) // 2
    word_w = params["word_weights"]

    def build_side(text, ids, rev_p, ui_p):
        tf = text.reshape(NB, -1)
        L = tf.shape[1]
        out_len = L + 2 * pad - K + 1
        emb = jnp.take(word_w, tf, axis=0)                      # (NB, L, wvd)
        emb = jnp.pad(emb, ((0, 0), (pad, pad), (0, 0)))        # (NB, L_pad, wvd)
        # im2col: last dim (K*wvd) is the lane-dense contraction for the MXU.
        x_col = jnp.concatenate(
            [emb[:, dt:dt + out_len, :] for dt in range(K)], axis=-1)
        x_col = x_col.astype(jnp.bfloat16)                      # halve activation DMA bytes
        w_col = jnp.transpose(rev_p["w_conv"], (0, 2, 1)).reshape(
            K * emb.shape[-1], -1).astype(jnp.bfloat16)         # (K*wvd, Ck)
        b_row = rev_p["b_conv"].reshape(1, -1).astype(jnp.float32)
        # Hoisted review-level id-attention query (identical for all R reviews of a row).
        idv = jnp.take(rev_p["id_emb"], ids, axis=0)
        g = jax.nn.relu(idv @ rev_p["w1"] + rev_p["b1"]) @ rev_p["a1"]    # (B, Ck)
        g = jnp.repeat(g, R, axis=0)                            # (NB, Ck)
        # Hoisted UI-level id-attention query.
        idv2 = jnp.take(ui_p["id_emb"], ids, axis=0)
        e = jax.nn.relu(idv2 @ ui_p["w1"] + ui_p["b1"]) @ ui_p["a1"]      # (B, Ck)
        return x_col, w_col, b_row, g, e, out_len

    xu, wu, bu, gu, eu, out_len = build_side(u_text, u_ids, params["u_rev"], params["u_ui"])
    xi, wi, bi, gi, ei, _ = build_side(i_text, i_ids, params["i_rev"], params["i_ui"])

    # Merge user/item pipelines into one pallas_call each via a leading size-2 axis.
    x_col = jnp.stack([xu, xi])                                 # (2, NB, out_len, K*wvd)
    w_col = jnp.stack([wu, wi])
    b_row = jnp.stack([bu, bi])
    g = jnp.stack([gu, gi])
    e = jnp.stack([eu, ei])

    d = review_encoder_call(x_col, g, w_col, b_row, tile_n=tile_n)   # (2, NB, Ck)
    Ck = d.shape[-1]
    feat = d.reshape(2, B, R, Ck)                               # lane-dense (B, R, Ck)
    pq = ui_encoder_call(feat, e)                               # (2, B, Ck)
    pu, qi = pq[0], pq[1]

    # Factorization machine epilogue in plain XLA (a pallas_call here would be pure
    # launch overhead at (B, 2*Ck)).
    x = jnp.concatenate([pu, qi], axis=1)
    fm = params["fm"]
    lin = x @ fm["w"] + fm["b0"]
    xv = x @ fm["v"]
    x2v2 = (x * x) @ (fm["v"] * fm["v"])
    return lin + 0.5 * jnp.sum(xv * xv - x2v2, axis=1, keepdims=True)


# ----------------------------- plain-JAX reference -------------------------- #

def reference_forward(params, u_text, i_text, u_ids, i_ids, *, review_size, conv_length):
    # Mirrors the PyTorch module. The conv matmul operands are cast to bf16 (f32
    # accumulation) to match the kernel's deliberate MXU dtype choice.
    B = u_ids.shape[0]
    NB = B * review_size
    pad = (conv_length - 1) // 2

    def review_net(text, ids, p):
        tf = text.reshape(NB, -1)
        L = tf.shape[1]
        mul_ids = jnp.repeat(ids, review_size)
        emb = jnp.take(params["word_weights"], tf, axis=0)
        x = jnp.transpose(emb, (0, 2, 1))
        xp = jnp.pad(x, ((0, 0), (0, 0), (pad, pad)))
        Ck = p["w_conv"].shape[1]
        c = jnp.zeros((NB, Ck, L), jnp.float32)
        for dt in range(conv_length):
            c = c + jnp.einsum("of,nfl->nol",
                               p["w_conv"][dt].astype(jnp.bfloat16),
                               xp[:, :, dt:dt + L].astype(jnp.bfloat16),
                               preferred_element_type=jnp.float32)
        c = jax.nn.relu(c + p["b_conv"][None, :, None])
        idv = jnp.take(p["id_emb"], mul_ids, axis=0)
        qw = jax.nn.relu(idv @ p["w1"] + p["b1"])
        g = qw @ p["a1"]
        alph = jax.nn.softmax(jnp.einsum("nk,nkl->nl", g, c), axis=-1)
        return jnp.einsum("nkl,nl->nk", c, alph)

    def ui_net(feat, ids, p):                                   # feat: (B, Ck, R)
        idv = jnp.take(p["id_emb"], ids, axis=0)
        qr = jax.nn.relu(idv @ p["w1"] + p["b1"])
        e = qr @ p["a1"]
        beta = jax.nn.softmax(jnp.einsum("bk,bkr->br", e, feat), axis=-1)
        return jnp.einsum("bkr,br->bk", feat, beta)

    d_u = review_net(u_text, u_ids, params["u_rev"]).reshape(B, review_size, -1).transpose(0, 2, 1)
    d_i = review_net(i_text, i_ids, params["i_rev"]).reshape(B, review_size, -1).transpose(0, 2, 1)
    pu = ui_net(d_u, u_ids, params["u_ui"])
    qi = ui_net(d_i, i_ids, params["i_ui"])
    x = jnp.concatenate([pu, qi], axis=1)
    fm = params["fm"]
    lin = x @ fm["w"] + fm["b0"]
    xv = x @ fm["v"]
    x2v2 = (x * x) @ (fm["v"] * fm["v"])
    return lin + 0.5 * jnp.sum(xv * xv - x2v2, axis=1, keepdims=True)


# -------------------------------- param init --------------------------------- #

def init_params(key, *, vocab, wvd, K, Ck, u_len, i_len, id_dim, atten, fm_k):
    keys = iter(jax.random.split(key, 32))

    def nxt(shape, scale=0.1):
        return scale * jax.random.normal(next(keys), shape, jnp.float32)

    def rev_params(id_len):
        return dict(
            id_emb=nxt((id_len, id_dim)),
            w_conv=nxt((K, Ck, wvd)),        # Conv1d weight stored as (K, out, in)
            b_conv=nxt((Ck,)),
            w1=nxt((id_dim, atten)),         # Linear weight stored transposed
            b1=nxt((1, atten)),
            a1=nxt((atten, Ck)),
        )

    def ui_params(id_len):
        return dict(
            id_emb=nxt((id_len, id_dim)),
            w1=nxt((id_dim, atten)),
            b1=nxt((1, atten)),
            a1=nxt((atten, Ck)),
        )

    return dict(
        word_weights=nxt((vocab, wvd), scale=1.0),
        u_rev=rev_params(u_len),
        i_rev=rev_params(i_len),
        u_ui=ui_params(u_len),
        i_ui=ui_params(i_len),
        fm=dict(w=nxt((2 * Ck, 1)), b0=nxt((1, 1)), v=nxt((2 * Ck, fm_k))),
    )


# ----------------------------------- main ------------------------------------ #

if __name__ == "__main__":
    B, R, L = 2, 4, 16                   # batch, review_size, review length
    vocab, wvd = 50, 32                  # vocab size, word_vec_dim
    K, Ck = 3, 32                        # conv_length, conv_kernel_num
    u_len, i_len = 10, 12                # user / item id table sizes
    id_dim, atten, fm_k = 16, 16, 8      # id_embedding_dim, atten_vec_dim, fm_k

    key = jax.random.PRNGKey(0)
    kp, kd = jax.random.split(key)
    params = init_params(kp, vocab=vocab, wvd=wvd, K=K, Ck=Ck, u_len=u_len,
                         i_len=i_len, id_dim=id_dim, atten=atten, fm_k=fm_k)

    k1, k2, k3, k4 = jax.random.split(kd, 4)
    u_text = jax.random.randint(k1, (B, R, L), 0, vocab, dtype=jnp.int32)
    i_text = jax.random.randint(k2, (B, R, L), 0, vocab, dtype=jnp.int32)
    u_ids = jax.random.randint(k3, (B,), 0, u_len, dtype=jnp.int32)
    i_ids = jax.random.randint(k4, (B,), 0, i_len, dtype=jnp.int32)

    fwd = jax.jit(functools.partial(pallas_forward, review_size=R, conv_length=K))
    rate = jax.block_until_ready(fwd(params, u_text, i_text, u_ids, i_ids))

    ref = reference_forward(params, u_text, i_text, u_ids, i_ids,
                            review_size=R, conv_length=K)
    assert rate.shape == (B, 1), rate.shape
    # Tolerance covers the approx-reciprocal softmax normalization and f32
    # accumulation-order differences (the bf16 matmul cast is matched in the reference).
    assert bool(jnp.allclose(rate, ref, rtol=2e-2, atol=2e-2)), (rate, ref)
    print("KERNEL_OK")
</pallas_src>

<mosaic_0001>
module attributes {stable_mosaic.version = 11 : i64} {
  func.func @review_encoder_kernel(%arg0: i32, %arg1: i32, %arg2: memref<1x128x96xbf16, #tpu.memory_space<vmem>>, %arg3: memref<1x8x1x32xf32, #tpu.memory_space<vmem>>, %arg4: memref<1x96x32xbf16, #tpu.memory_space<vmem>>, %arg5: memref<1x1x32xf32, #tpu.memory_space<vmem>>, %arg6: memref<1x8x1x32xf32, #tpu.memory_space<vmem>>) attributes {dimension_semantics = [#tpu.dimension_semantics<parallel>, #tpu.dimension_semantics<parallel>], iteration_bounds = array<i64: 2, 1>, scalar_prefetch = 0 : i64, scratch_operands = 0 : i64, tpu.core_type = #tpu.core_type<tc>, window_params = [{transform_indices = @transform_0, window_bounds = array<i64: 1, 128, 96>}, {transform_indices = @transform_1, window_bounds = array<i64: 1, 8, 1, 32>}, {transform_indices = @transform_2, window_bounds = array<i64: 1, 96, 32>}, {transform_indices = @transform_3, window_bounds = array<i64: 1, 1, 32>}, {transform_indices = @transform_4, window_bounds = array<i64: 1, 8, 1, 32>}]} {
    %c0 = arith.constant 0 : index
    %c0_0 = arith.constant 0 : index
    %c0_1 = arith.constant 0 : index
    %0 = vector.load %arg2[%c0, %c0_0, %c0_1] : memref<1x128x96xbf16, #tpu.memory_space<vmem>>, vector<1x128x96xbf16>
    %1 = vector.shape_cast %0 : vector<1x128x96xbf16> to vector<128x96xbf16>
    %c0_2 = arith.constant 0 : index
    %c0_3 = arith.constant 0 : index
    %c0_4 = arith.constant 0 : index
    %2 = vector.load %arg4[%c0_2, %c0_3, %c0_4] : memref<1x96x32xbf16, #tpu.memory_space<vmem>>, vector<1x96x32xbf16>
    %3 = vector.shape_cast %2 : vector<1x96x32xbf16> to vector<96x32xbf16>
    %cst = arith.constant dense<0.000000e+00> : vector<128x32xf32>
    %4 = tpu.matmul %1, %3, %cst {dimension_numbers = #tpu.dot_dimension_numbers<[1], [0], [0], [1], [0, 0, 1, 1], [], []>} : vector<128x96xbf16>, vector<96x32xbf16>, vector<128x32xf32> -> vector<128x32xf32>
    %c0_5 = arith.constant 0 : index
    %c0_6 = arith.constant 0 : index
    %c0_7 = arith.constant 0 : index
    %5 = vector.load %arg5[%c0_5, %c0_6, %c0_7] : memref<1x1x32xf32, #tpu.memory_space<vmem>>, vector<1x1x32xf32>
    %6 = vector.shape_cast %5 : vector<1x1x32xf32> to vector<1x32xf32>
    %7 = vector.broadcast %6 : vector<1x32xf32> to vector<128x32xf32>
    %8 = arith.addf %4, %7 : vector<128x32xf32>
    %cst_8 = arith.constant 0.000000e+00 : f32
    %9 = vector.broadcast %cst_8 : f32 to vector<128x32xf32>
    %10 = arith.maximumf %8, %9 : vector<128x32xf32>
    %11 = vector.shape_cast %10 : vector<128x32xf32> to vector<8x16x32xf32>
    %c0_9 = arith.constant 0 : index
    %c0_10 = arith.constant 0 : index
    %c0_11 = arith.constant 0 : index
    %c0_12 = arith.constant 0 : index
    %12 = vector.load %arg3[%c0_9, %c0_10, %c0_11, %c0_12] : memref<1x8x1x32xf32, #tpu.memory_space<vmem>>, vector<1x8x1x32xf32>
    %13 = vector.shape_cast %12 : vector<1x8x1x32xf32> to vector<8x1x32xf32>
    "tpu.trace_start"() <{level = 10 : i32, message = "nqk,nlk->nql"}> : () -> ()
    %cst_13 = arith.constant dense<0.000000e+00> : vector<8x1x16xf32>
    %14 = tpu.matmul %13, %11, %cst_13 {dimension_numbers = #tpu.dot_dimension_numbers<[2], [2], [1], [1], [0, 0, 0, 1, 1, 1], [0], [0]>} : vector<8x1x32xf32>, vector<8x16x32xf32>, vector<8x1x16xf32> -> vector<8x1x16xf32>
    "tpu.trace_stop"() : () -> ()
    %cst_14 = arith.constant dense<0xFF800000> : vector<8x1xf32>
    %15 = vector.multi_reduction <maximumf>, %14, %cst_14 [2] : vector<8x1x16xf32> to vector<8x1xf32>
    %16 = vector.shape_cast %15 : vector<8x1xf32> to vector<8x1x1xf32>
    %17 = vector.broadcast %16 : vector<8x1x1xf32> to vector<8x1x16xf32>
    %18 = arith.subf %14, %17 : vector<8x1x16xf32>
    %19 = math.exp %18 : vector<8x1x16xf32>
    %cst_15 = arith.constant dense<0.000000e+00> : vector<8x1xf32>
    %20 = vector.multi_reduction <add>, %19, %cst_15 [2] : vector<8x1x16xf32> to vector<8x1xf32>
    %21 = vector.shape_cast %20 : vector<8x1xf32> to vector<8x1x1xf32>
    %22 = tpu.reciprocal %21 {approx = true} : vector<8x1x1xf32> -> vector<8x1x1xf32>
    %23 = vector.broadcast %22 : vector<8x1x1xf32> to vector<8x1x16xf32>
    %24 = arith.mulf %19, %23 : vector<8x1x16xf32>
    "tpu.trace_start"() <{level = 10 : i32, message = "nql,nlk->nqk"}> : () -> ()
    %cst_16 = arith.constant dense<0.000000e+00> : vector<8x1x32xf32>
    %25 = tpu.matmul %24, %11, %cst_16 {dimension_numbers = #tpu.dot_dimension_numbers<[2], [1], [1], [2], [0, 0, 0, 1, 1, 2], [0], [0]>} : vector<8x1x16xf32>, vector<8x16x32xf32>, vector<8x1x32xf32> -> vector<8x1x32xf32>
    "tpu.trace_stop"() : () -> ()
    %26 = vector.shape_cast %25 : vector<8x1x32xf32> to vector<1x8x1x32xf32>
    %c0_17 = arith.constant 0 : index
    %c0_18 = arith.constant 0 : index
    %c0_19 = arith.constant 0 : index
    %c0_20 = arith.constant 0 : index
    %27 = vector.load %arg6[%c0_17, %c0_18, %c0_19, %c0_20] : memref<1x8x1x32xf32, #tpu.memory_space<vmem>>, vector<1x8x1x32xf32>
    tpu.vector_store %arg6[%c0_17, %c0_18, %c0_19, %c0_20], %26 {strides = array<i32>} : memref<1x8x1x32xf32, #tpu.memory_space<vmem>>, vector<1x8x1x32xf32>,
    return
  }
  func.func @transform_0(%arg0: i32, %arg1: i32) -> (i32, i32, i32) {
    %c0_i32 = arith.constant 0 : i32
    %c0_i32_0 = arith.constant 0 : i32
    return %arg0, %arg1, %c0_i32 : i32, i32, i32
  }
  func.func @transform_1(%arg0: i32, %arg1: i32) -> (i32, i32, i32, i32) {
    %c0_i32 = arith.constant 0 : i32
    %c0_i32_0 = arith.constant 0 : i32
    %c0_i32_1 = arith.constant 0 : i32
    return %arg0, %arg1, %c0_i32, %c0_i32_0 : i32, i32, i32, i32
  }
  func.func @transform_2(%arg0: i32, %arg1: i32) -> (i32, i32, i32) {
    %c0_i32 = arith.constant 0 : i32
    %c0_i32_0 = arith.constant 0 : i32
    %c0_i32_1 = arith.constant 0 : i32
    return %arg0, %c0_i32, %c0_i32_0 : i32, i32, i32
  }
  func.func @transform_3(%arg0: i32, %arg1: i32) -> (i32, i32, i32) {
    %c0_i32 = arith.constant 0 : i32
    %c0_i32_0 = arith.constant 0 : i32
    %c0_i32_1 = arith.constant 0 : i32
    return %arg0, %c0_i32, %c0_i32_0 : i32, i32, i32
  }
  func.func @transform_4(%arg0: i32, %arg1: i32) -> (i32, i32, i32, i32) {
    %c0_i32 = arith.constant 0 : i32
    %c0_i32_0 = arith.constant 0 : i32
    %c0_i32_1 = arith.constant 0 : i32
    return %arg0, %arg1, %c0_i32, %c0_i32_0 : i32, i32, i32, i32
  }
}

module attributes {stable_mosaic.version = 11 : i64} {
  func.func @ui_encoder_kernel(%arg0: i32, %arg1: memref<1x2x4x32xf32, #tpu.memory_space<vmem>>, %arg2: memref<1x2x1x32xf32, #tpu.memory_space<vmem>>, %arg3: memref<1x2x1x32xf32, #tpu.memory_space<vmem>>) attributes {dimension_semantics = [#tpu.dimension_semantics<parallel>], iteration_bounds = array<i64: 2>, scalar_prefetch = 0 : i64, scratch_operands = 0 : i64, tpu.core_type = #tpu.core_type<tc>, window_params = [{transform_indices = @transform_0, window_bounds = array<i64: 1, 2, 4, 32>}, {transform_indices = @transform_1, window_bounds = array<i64: 1, 2, 1, 32>}, {transform_indices = @transform_2, window_bounds = array<i64: 1, 2, 1, 32>}]} {
    %c0 = arith.constant 0 : index
    %c0_0 = arith.constant 0 : index
    %c0_1 = arith.constant 0 : index
    %c0_2 = arith.constant 0 : index
    %0 = vector.load %arg1[%c0, %c0_0, %c0_1, %c0_2] : memref<1x2x4x32xf32, #tpu.memory_space<vmem>>, vector<1x2x4x32xf32>
    %1 = vector.shape_cast %0 : vector<1x2x4x32xf32> to vector<2x4x32xf32>
    %c0_3 = arith.constant 0 : index
    %c0_4 = arith.constant 0 : index
    %c0_5 = arith.constant 0 : index
    %c0_6 = arith.constant 0 : index
    %2 = vector.load %arg2[%c0_3, %c0_4, %c0_5, %c0_6] : memref<1x2x1x32xf32, #tpu.memory_space<vmem>>, vector<1x2x1x32xf32>
    %3 = vector.shape_cast %2 : vector<1x2x1x32xf32> to vector<2x1x32xf32>
    "tpu.trace_start"() <{level = 10 : i32, message = "bqk,brk->bqr"}> : () -> ()
    %cst = arith.constant dense<0.000000e+00> : vector<2x1x4xf32>
    %4 = tpu.matmul %3, %1, %cst {dimension_numbers = #tpu.dot_dimension_numbers<[2], [2], [1], [1], [0, 0, 0, 1, 1, 1], [0], [0]>} : vector<2x1x32xf32>, vector<2x4x32xf32>, vector<2x1x4xf32> -> vector<2x1x4xf32>
    "tpu.trace_stop"() : () -> ()
    %cst_7 = arith.constant dense<0xFF800000> : vector<2x1xf32>
    %5 = vector.multi_reduction <maximumf>, %4, %cst_7 [2] : vector<2x1x4xf32> to vector<2x1xf32>
    %6 = vector.shape_cast %5 : vector<2x1xf32> to vector<2x1x1xf32>
    %7 = vector.broadcast %6 : vector<2x1x1xf32> to vector<2x1x4xf32>
    %8 = arith.subf %4, %7 : vector<2x1x4xf32>
    %9 = math.exp %8 : vector<2x1x4xf32>
    %cst_8 = arith.constant dense<0.000000e+00> : vector<2x1xf32>
    %10 = vector.multi_reduction <add>, %9, %cst_8 [2] : vector<2x1x4xf32> to vector<2x1xf32>
    %11 = vector.shape_cast %10 : vector<2x1xf32> to vector<2x1x1xf32>
    %12 = tpu.reciprocal %11 {approx = true} : vector<2x1x1xf32> -> vector<2x1x1xf32>
    %13 = vector.broadcast %12 : vector<2x1x1xf32> to vector<2x1x4xf32>
    %14 = arith.mulf %9, %13 : vector<2x1x4xf32>
    "tpu.trace_start"() <{level = 10 : i32, message = "bqr,brk->bqk"}> : () -> ()
    %cst_9 = arith.constant dense<0.000000e+00> : vector<2x1x32xf32>
    %15 = tpu.matmul %14, %1, %cst_9 {dimension_numbers = #tpu.dot_dimension_numbers<[2], [1], [1], [2], [0, 0, 0, 1, 1, 2], [0], [0]>} : vector<2x1x4xf32>, vector<2x4x32xf32>, vector<2x1x32xf32> -> vector<2x1x32xf32>
    "tpu.trace_stop"() : () -> ()
    %16 = vector.shape_cast %15 : vector<2x1x32xf32> to vector<1x2x1x32xf32>
    %c0_10 = arith.constant 0 : index
    %c0_11 = arith.constant 0 : index
    %c0_12 = arith.constant 0 : index
    %c0_13 = arith.constant 0 : index
    %17 = vector.load %arg3[%c0_10, %c0_11, %c0_12, %c0_13] : memref<1x2x1x32xf32, #tpu.memory_space<vmem>>, vector<1x2x1x32xf32>
    tpu.vector_store %arg3[%c0_10, %c0_11, %c0_12, %c0_13], %16 {strides = array<i32>} : memref<1x2x1x32xf32, #tpu.memory_space<vmem>>, vector<1x2x1x32xf32>,
    return
  }
  func.func @transform_0(%arg0: i32) -> (i32, i32, i32, i32) {
    %c0_i32 = arith.constant 0 : i32
    %c0_i32_0 = arith.constant 0 : i32
    %c0_i32_1 = arith.constant 0 : i32
    %c0_i32_2 = arith.constant 0 : i32
    return %arg0, %c0_i32, %c0_i32_0, %c0_i32_1 : i32, i32, i32, i32
  }
  func.func @transform_1(%arg0: i32) -> (i32, i32, i32, i32) {
    %c0_i32 = arith.constant 0 : i32
    %c0_i32_0 = arith.constant 0 : i32
    %c0_i32_1 = arith.constant 0 : i32
    %c0_i32_2 = arith.constant 0 : i32
    return %arg0, %c0_i32, %c0_i32_0, %c0_i32_1 : i32, i32, i32, i32
  }
  func.func @transform_2(%arg0: i32) -> (i32, i32, i32, i32) {
    %c0_i32 = arith.constant 0 : i32
    %c0_i32_0 = arith.constant 0 : i32
    %c0_i32_1 = arith.constant 0 : i32
    %c0_i32_2 = arith.constant 0 : i32
    return %arg0, %c0_i32, %c0_i32_0, %c0_i32_1 : i32, i32, i32, i32
  }
}

</mosaic_0001>

<llo_original>
// kernel: pallas_forward.3
$region0: #{pallas_forward.3}
  #allocation0 [shape = 'u32[]', space=smem, size = 0x4, offset = 0x4, fixed_abs, tag = 'smem constant byte address 0x4 - core index']
  #allocation1 [shape = 'u32[144,128]{1,0:T(1,128)}', space=vmem, size = 0x12000, scoped, tag = 'internal scratch']
  %s0 = inlined_call_operand.vmem [shape: f32[2,2,4,32], index: 0, kind: input, shape index: {}]
  %s1 = inlined_call_operand.vmem [shape: f32[2,2,1,32], index: 1, kind: input, shape index: {}]
  %s2 = inlined_call_operand.vmem [shape: f32[2,2,1,32], index: 2, kind: output, shape index: {}]
  %s3 = sld [smem:[#allocation0]]
  $region41: #{pallas_forward.3} parent=0
    _
  %s5 = ssub.s32 1, %s3
  %s6 = scalar_select 0, %s5, %s3
  loop: start=0, step=1, limit=4
  $region2: #{pallas_forward.3} parent=0 // loop_pre_header
    _
  $region3: #{pallas_forward.3} parent=0 // loop_header
    %s8 = sphi 0, %s12
    %p9 = scmp.ge.s32.totalorder %s8, 4
    %s18 = sphi 0, %s20
    %s21 = sphi 0, %s18
    %s22 = sphi 0, %s21
    %s38 = sphi 0, %s22
    %s44 = sphi 0, %s46
    %s47 = sphi 0, %s44
    %s48 = sphi 0, %s47
    %s64 = sphi 0, %s48
    %s70 = sphi 0, %s72
    %s73 = sphi 0, %s70
    %s74 = sphi 0, %s73
    %s90 = sphi 0, %s74
  $region4: #{pallas_forward.3} parent=0 // loop_header_branch
    %11 = sbr.rel (%p9) target = $region8
  $region5: #{pallas_forward.3} parent=0 // loop_body
    %s13 = ssub.s32 %s8, 1
    %s14 = ssub.s32 %s8, 2
    %s15 = sadd.s32 %s8, 1
    %s16 = ssub.s32 %s8, %s15
    %p17 = scmp.eq.s32.totalorder %s16, 0
    %s19 = sadd.s32 %s18, 1
    %s20 = scalar_select %p17, %s18, %s19
    %p23 = pneg %p17
    %p24 = scmp.eq.s32.totalorder %s8, 1
    %p25 = por %p23, %p24
    %p26 = scmp.ne.s32.totalorder %s18, %s21
    %p27 = scmp.eq.s32.totalorder %s8, 0
    %p28 = por %p26, %p27
    %p29 = scmp.ne.s32.totalorder %s18, %s21
    %p30 = scmp.eq.s32.totalorder %s13, 1
    %p31 = por %p29, %p30
    %p32 = scmp.ne.s32.totalorder %s21, %s22
    %p33 = scmp.eq.s32.totalorder %s13, 0
    %p34 = por %p32, %p33
    %p35 = scmp.ne.s32.totalorder %s21, %s22
    %p36 = scmp.eq.s32.totalorder %s14, 1
    %p37 = por %p35, %p36
    %p39 = scmp.ne.s32.totalorder %s22, %s38
    %p40 = scmp.eq.s32.totalorder %s14, 0
    %p41 = por %p39, %p40
    %s42 = ssub.s32 %s8, %s15
    %p43 = scmp.eq.s32.totalorder %s42, 0
    %s45 = sadd.s32 %s44, 1
    %s46 = scalar_select %p43, %s44, %s45
    %p49 = pneg %p43
    %p50 = scmp.eq.s32.totalorder %s8, 1
    %p51 = por %p49, %p50
    %p52 = scmp.ne.s32.totalorder %s44, %s47
    %p53 = scmp.eq.s32.totalorder %s8, 0
    %p54 = por %p52, %p53
    %p55 = scmp.ne.s32.totalorder %s44, %s47
    %p56 = scmp.eq.s32.totalorder %s13, 1
    %p57 = por %p55, %p56
    %p58 = scmp.ne.s32.totalorder %s47, %s48
    %p59 = scmp.eq.s32.totalorder %s13, 0
    %p60 = por %p58, %p59
    %p61 = scmp.ne.s32.totalorder %s47, %s48
    %p62 = scmp.eq.s32.totalorder %s14, 1
    %p63 = por %p61, %p62
    %p65 = scmp.ne.s32.totalorder %s48, %s64
    %p66 = scmp.eq.s32.totalorder %s14, 0
    %p67 = por %p65, %p66
    %s68 = ssub.s32 %s8, %s15
    %p69 = scmp.eq.s32.totalorder %s68, 0
    %s71 = sadd.s32 %s70, 1
    %s72 = scalar_select %p69, %s70, %s71
    %p75 = pneg %p69
    %p76 = scmp.eq.s32.totalorder %s8, 1
    %p77 = por %p75, %p76
    %p78 = scmp.ne.s32.totalorder %s70, %s73
    %p79 = scmp.eq.s32.totalorder %s8, 0
    %p80 = por %p78, %p79
    %p81 = scmp.ne.s32.totalorder %s70, %s73
    %p82 = scmp.eq.s32.totalorder %s13, 1
    %p83 = por %p81, %p82
    %p84 = scmp.ne.s32.totalorder %s73, %s74
    %p85 = scmp.eq.s32.totalorder %s13, 0
    %p86 = por %p84, %p85
    %p87 = scmp.ne.s32.totalorder %s73, %s74
    %p88 = scmp.eq.s32.totalorder %s14, 1
    %p89 = por %p87, %p88
    %p91 = scmp.ne.s32.totalorder %s74, %s90
    %p92 = scmp.eq.s32.totalorder %s14, 0
    %p93 = por %p91, %p92
    %p94 = scmp.le.s32.totalorder 1, %s8
    %p95 = scmp.lt.s32.totalorder %s8, 3
    %p96 = pnand %p94, %p95
    %p97 = pneg %p96
    // Predicated region
    $region9: #{pallas_forward.3} parent=5 // pred_check
      _
    $region10: #{pallas_forward.3} parent=5 // pred_check_branch
      %99 = sbr.rel (%p96) target = $region12
    $region11: #{pallas_forward.3} parent=5 // pred_region
      %s100 = ssub.s32 %s8, 1
    $region12: #{pallas_forward.3} parent=5 // pred_fallthru
      _
    %p101 = scmp.lt.s32.totalorder %s8, 2
    // Predicated region
    $region13: #{pallas_forward.3} parent=5 // pred_check
      %p102 = pneg %p101
    $region14: #{pallas_forward.3} parent=5 // pred_check_branch
      %104 = sbr.rel (%p102) target = $region16
    $region15: #{pallas_forward.3} parent=5 // pred_region
      // Predicated region
      $region17: #{pallas_forward.3} parent=15 // pred_check
        %p105 = pneg %p28
      $region18: #{pallas_forward.3} parent=15 // pred_check_branch
        %107 = sbr.rel (%p105) target = $region20
      $region19: #{pallas_forward.3} parent=15 // pred_region
        %p108 = scmp.lt.s32.totalorder %s8, 1
        %s109 = scalar_select %p108, %s8, 1
        %s110 = smul.addr %s109, 2
        %s111 = smul.addr %s110, 4
        %s112 = scalar_lea.vmem %s0, %s111
      $region20: #{pallas_forward.3} parent=15 // pred_fallthru
        _
      // Predicated region
      $region21: #{pallas_forward.3} parent=15 // pred_check
        %p113 = pneg %p54
      $region22: #{pallas_forward.3} parent=15 // pred_check_branch
        %115 = sbr.rel (%p113) target = $region24
      $region23: #{pallas_forward.3} parent=15 // pred_region
        %p116 = scmp.lt.s32.totalorder %s8, 1
        %s117 = scalar_select %p116, %s8, 1
        %s118 = smul.addr %s117, 2
        %s119 = scalar_lea.vmem %s1, %s118
      $region24: #{pallas_forward.3} parent=15 // pred_fallthru
        _
    $region16: #{pallas_forward.3} parent=5 // pred_fallthru
      _
    %p120 = scmp.le.s32.totalorder 1, %s8
    %p121 = scmp.lt.s32.totalorder %s8, 3
    %p122 = pnand %p120, %p121
    %p123 = pneg %p122
    // Predicated region
    $region25: #{pallas_forward.3} parent=5 // pred_check
      _
    $region26: #{pallas_forward.3} parent=5 // pred_check_branch
      %125 = sbr.rel (%p122) target = $region28
    $region27: #{pallas_forward.3} parent=5 // pred_region
      %s126 = ssub.s32 %s8, 1
      %p127 = scmp.lt.s32.totalorder %s13, 1
      %s128 = scalar_select %p127, %s13, 1
      %s129 = smul.addr %s128, 2
      %s130 = smul.addr %s129, 4
      %s131 = scalar_lea.vmem %s0, %s130
      %p132 = pneg %p34
      %p133 = pneg %p31
      %p134 = scmp.lt.s32.totalorder %s13, 1
      %s135 = scalar_select %p134, %s13, 1
      %s136 = smul.addr %s135, 2
      %s137 = scalar_lea.vmem %s1, %s136
      %p138 = pneg %p60
      %p139 = pneg %p57
      %p140 = pneg %p86
      %p141 = pneg %p83
      %p142 = scmp.lt.s32.totalorder %s13, 1
      %s143 = scalar_select %p142, %s13, 1
      %s144 = smul.addr %s143, 2
      %s145 = scalar_lea.vmem %s2, %s144
      %p146 = scmp.lt.s32.totalorder %s13, 1
      %s147 = scalar_select %p146, %s13, 1
      %s148 = smul.addr %s147, 2
      %s149 = smul.addr %s148, 4
      %s150 = scalar_lea.vmem %s0, %s149
      %p151 = scmp.lt.s32.totalorder %s13, 1
      %s152 = scalar_select %p151, %s13, 1
      %s153 = smul.addr %s152, 2
      %s154 = scalar_lea.vmem %s1, %s153
      %p155 = scmp.lt.s32.totalorder %s13, 1
      %s156 = scalar_select %p155, %s13, 1
      %s157 = smul.addr %s156, 2
      %s158 = scalar_lea.vmem %s2, %s157
      %v159 = vld [vmem:[%s150] sm:$0xf]
      %v160 = vld [vmem:[%s150 + $0x4] sm:$0xf]
      %v161 = vld [vmem:[%s154] sm:$0x1]
      %v162 = vld [vmem:[%s154 + $0x1] sm:$0x1]
      %vm163 = vcmask 261120
      %v165 = vsel %vm163, %v161, 0
      %v168 = vsel %vm163, %v159, 0
      %170 = vmatprep.subr.mxu0 0.0
      %171 = vmatpush1.xpose.msra.mxu0 %v168
      %172 = vmatprep.subr.mxu0 0.0
      %173 = vmatpush1.xpose.msra.mxu0 0.0
      %174 = vmatprep.subr.mxu0 0.0
      %175 = vmatpush1.xpose.msra.mxu0 0.0
      %176 = vmatprep.subr.mxu0 0.0
      %177 = vmatpush1.xpose.msra.mxu0 0.0
      %178 = vmatprep.subr.mxu0 0.0
      %179 = vmatpush1.xpose.msra.mxu0 0.0
      %180 = vmatprep.subr.mxu0 0.0
      %181 = vmatpush1.xpose.msra.mxu0 0.0
      %182 = vmatprep.subr.mxu0 0.0
      %183 = vmatpush1.xpose.msra.mxu0 0.0
      %184 = vmatprep.subr.mxu0 0.0
      %185 = vmatpush1.xpose.msra.mxu0 0.0
      %186 = vmatprep.subr.mxu0 0.0
      %187 = vmatpush1.xpose.msra.mxu0 0.0
      %188 = vmatprep.subr.mxu0 0.0
      %189 = vmatpush1.xpose.msra.mxu0 0.0
      %190 = vmatprep.subr.mxu0 0.0
      %191 = vmatpush1.xpose.msra.mxu0 0.0
      %192 = vmatprep.subr.mxu0 0.0
      %193 = vmatpush1.xpose.msra.mxu0 0.0
      %194 = vmatprep.subr.mxu0 0.0
      %195 = vmatpush1.xpose.msra.mxu0 0.0
      %196 = vmatprep.subr.mxu0 0.0
      %197 = vmatpush1.xpose.msra.mxu0 0.0
      %198 = vmatprep.subr.mxu0 0.0
      %199 = vmatpush1.xpose.msra.mxu0 0.0
      %200 = vmatprep.subr.mxu0 0.0
      %201 = vmatpush1.xpose.msra.mxu0 0.0
      %202 = vmatprep.subr.mxu0 0.0
      %203 = vmatpush1.xpose.msra.mxu0 0.0
      %204 = vmatprep.subr.mxu0 0.0
      %205 = vmatpush1.xpose.msra.mxu0 0.0
      %206 = vmatprep.subr.mxu0 0.0
      %207 = vmatpush1.xpose.msra.mxu0 0.0
      %208 = vmatprep.subr.mxu0 0.0
      %209 = vmatpush1.xpose.msra.mxu0 0.0
      %210 = vmatprep.subr.mxu0 0.0
      %211 = vmatpush1.xpose.msra.mxu0 0.0
      %212 = vmatprep.subr.mxu0 0.0
      %213 = vmatpush1.xpose.msra.mxu0 0.0
      %214 = vmatprep.subr.mxu0 0.0
      %215 = vmatpush1.xpose.msra.mxu0 0.0
      %216 = vmatprep.subr.mxu0 0.0
      %217 = vmatpush1.xpose.msra.mxu0 0.0
      %218 = vmatprep.subr.mxu0 0.0
      %219 = vmatpush1.xpose.msra.mxu0 0.0
      %220 = vmatprep.subr.mxu0 0.0
      %221 = vmatpush1.xpose.msra.mxu0 0.0
      %222 = vmatprep.subr.mxu0 0.0
      %223 = vmatpush1.xpose.msra.mxu0 0.0
      %224 = vmatprep.subr.mxu0 0.0
      %225 = vmatpush1.xpose.msra.mxu0 0.0
      %226 = vmatprep.subr.mxu0 0.0
      %227 = vmatpush1.xpose.msra.mxu0 0.0
      %228 = vmatprep.subr.mxu0 0.0
      %229 = vmatpush1.xpose.msra.mxu0 0.0
      %230 = vmatprep.subr.mxu0 0.0
      %231 = vmatpush1.xpose.msra.mxu0 0.0
      %232 = vmatprep.subr.mxu0 0.0
      %233 = vmatpush1.xpose.msra.mxu0 0.0
      %234 = vmatprep.mubr.f32.mxu0 0.0
      %235 = vmatmul.mubr.f32.gmra.mrb[0].mxu0 %v165
      %v236 = vpop.f32.mrb[0].mxu0
      %v237 = vadd.f32 0.0, %v236
      %v238 = vpop.f32.mrb[0].mxu0
      %239 = vdwg.mxu0
      %v241 = vsel %vm163, %v162, 0
      %v244 = vsel %vm163, %v160, 0
      %246 = vmatprep.subr.mxu0 0.0
      %247 = vmatpush1.xpose.msra.mxu0 %v244
      %248 = vmatprep.subr.mxu0 0.0
      %249 = vmatpush1.xpose.msra.mxu0 0.0
      %250 = vmatprep.subr.mxu0 0.0
      %251 = vmatpush1.xpose.msra.mxu0 0.0
      %252 = vmatprep.subr.mxu0 0.0
      %253 = vmatpush1.xpose.msra.mxu0 0.0
      %254 = vmatprep.subr.mxu0 0.0
      %255 = vmatpush1.xpose.msra.mxu0 0.0
      %256 = vmatprep.subr.mxu0 0.0
      %257 = vmatpush1.xpose.msra.mxu0 0.0
      %258 = vmatprep.subr.mxu0 0.0
      %259 = vmatpush1.xpose.msra.mxu0 0.0
      %260 = vmatprep.subr.mxu0 0.0
      %261 = vmatpush1.xpose.msra.mxu0 0.0
      %262 = vmatprep.subr.mxu0 0.0
      %263 = vmatpush1.xpose.msra.mxu0 0.0
      %264 = vmatprep.subr.mxu0 0.0
      %265 = vmatpush1.xpose.msra.mxu0 0.0
      %266 = vmatprep.subr.mxu0 0.0
      %267 = vmatpush1.xpose.msra.mxu0 0.0
      %268 = vmatprep.subr.mxu0 0.0
      %269 = vmatpush1.xpose.msra.mxu0 0.0
      %270 = vmatprep.subr.mxu0 0.0
      %271 = vmatpush1.xpose.msra.mxu0 0.0
      %272 = vmatprep.subr.mxu0 0.0
      %273 = vmatpush1.xpose.msra.mxu0 0.0
      %274 = vmatprep.subr.mxu0 0.0
      %275 = vmatpush1.xpose.msra.mxu0 0.0
      %276 = vmatprep.subr.mxu0 0.0
      %277 = vmatpush1.xpose.msra.mxu0 0.0
      %278 = vmatprep.subr.mxu0 0.0
      %279 = vmatpush1.xpose.msra.mxu0 0.0
      %280 = vmatprep.subr.mxu0 0.0
      %281 = vmatpush1.xpose.msra.mxu0 0.0
      %282 = vmatprep.subr.mxu0 0.0
      %283 = vmatpush1.xpose.msra.mxu0 0.0
      %284 = vmatprep.subr.mxu0 0.0
      %285 = vmatpush1.xpose.msra.mxu0 0.0
      %286 = vmatprep.subr.mxu0 0.0
      %287 = vmatpush1.xpose.msra.mxu0 0.0
      %288 = vmatprep.subr.mxu0 0.0
      %289 = vmatpush1.xpose.msra.mxu0 0.0
      %290 = vmatprep.subr.mxu0 0.0
      %291 = vmatpush1.xpose.msra.mxu0 0.0
      %292 = vmatprep.subr.mxu0 0.0
      %293 = vmatpush1.xpose.msra.mxu0 0.0
      %294 = vmatprep.subr.mxu0 0.0
      %295 = vmatpush1.xpose.msra.mxu0 0.0
      %296 = vmatprep.subr.mxu0 0.0
      %297 = vmatpush1.xpose.msra.mxu0 0.0
      %298 = vmatprep.subr.mxu0 0.0
      %299 = vmatpush1.xpose.msra.mxu0 0.0
      %300 = vmatprep.subr.mxu0 0.0
      %301 = vmatpush1.xpose.msra.mxu0 0.0
      %302 = vmatprep.subr.mxu0 0.0
      %303 = vmatpush1.xpose.msra.mxu0 0.0
      %304 = vmatprep.subr.mxu0 0.0
      %305 = vmatpush1.xpose.msra.mxu0 0.0
      %306 = vmatprep.subr.mxu0 0.0
      %307 = vmatpush1.xpose.msra.mxu0 0.0
      %308 = vmatprep.subr.mxu0 0.0
      %309 = vmatpush1.xpose.msra.mxu0 0.0
      %310 = vmatprep.mubr.f32.mxu0 0.0
      %311 = vmatmul.mubr.f32.gmra.mrb[0].mxu0 %v241
      %v312 = vpop.f32.mrb[0].mxu0
      %v313 = vadd.f32 0.0, %v312
      %v314 = vpop.f32.mrb[0].mxu0
      %315 = vdwg.mxu0
      %vm316 = vcmask 24576
      %v317 = vsel %vm316, %v237, -inf
      %318 = vmax.xlane.f32.xlu0 %v317
      %v319 = vpop.xlane.xlu0 %318
      %v320 = vsel %vm316, %v313, -inf
      %321 = vmax.xlane.f32.xlu0 %v320
      %v322 = vpop.xlane.xlu0 %321
      %v323 = vsub.f32 %v237, %v319
      %v324 = vsub.f32 %v313, %v322
      %v325 = vmul.f32 %v323, 1.442695
      %v326 = vpow.pop %v325
      %v327 = vmul.f32 %v324, 1.442695
      %v328 = vpow.pop %v327
      %v329 = vsel %vm316, %v326, 0.0
      %330 = vadd.xlane.f32.xlu0 %v329
      %v331 = vpop.xlane.xlu0 %330
      %v332 = vsel %vm316, %v328, 0.0
      %333 = vadd.xlane.f32.xlu0 %v332
      %v334 = vpop.xlane.xlu0 %333
      %v335 = vrcp.pop %v331
      %v336 = vrcp.pop %v334
      %v337 = vmul.f32 %v326, %v335
      %v338 = vmul.f32 %v328, %v336
      %vm339 = vcmask 31744
      %v341 = vsel %vm339, %v337, 0
      %vm343 = vcmask 1043456
      %v344 = vsel %vm343, %v159, 0
      %346 = vmatprep.subr.mxu0 0.0
      %347 = vmatpush1.msra.mxu0 %v344
      %348 = vmatprep.subr.mxu0 0.0
      %349 = vmatpush1.msra.mxu0 0.0
      %350 = vmatprep.subr.mxu0 0.0
      %351 = vmatpush1.msra.mxu0 0.0
      %352 = vmatprep.subr.mxu0 0.0
      %353 = vmatpush1.msra.mxu0 0.0
      %354 = vmatprep.subr.mxu0 0.0
      %355 = vmatpush1.msra.mxu0 0.0
      %356 = vmatprep.subr.mxu0 0.0
      %357 = vmatpush1.msra.mxu0 0.0
      %358 = vmatprep.subr.mxu0 0.0
      %359 = vmatpush1.msra.mxu0 0.0
      %360 = vmatprep.subr.mxu0 0.0
      %361 = vmatpush1.msra.mxu0 0.0
      %362 = vmatprep.subr.mxu0 0.0
      %363 = vmatpush1.msra.mxu0 0.0
      %364 = vmatprep.subr.mxu0 0.0
      %365 = vmatpush1.msra.mxu0 0.0
      %366 = vmatprep.subr.mxu0 0.0
      %367 = vmatpush1.msra.mxu0 0.0
      %368 = vmatprep.subr.mxu0 0.0
      %369 = vmatpush1.msra.mxu0 0.0
      %370 = vmatprep.subr.mxu0 0.0
      %371 = vmatpush1.msra.mxu0 0.0
      %372 = vmatprep.subr.mxu0 0.0
      %373 = vmatpush1.msra.mxu0 0.0
      %374 = vmatprep.subr.mxu0 0.0
      %375 = vmatpush1.msra.mxu0 0.0
      %376 = vmatprep.subr.mxu0 0.0
      %377 = vmatpush1.msra.mxu0 0.0
      %378 = vmatprep.subr.mxu0 0.0
      %379 = vmatpush1.msra.mxu0 0.0
      %380 = vmatprep.subr.mxu0 0.0
      %381 = vmatpush1.msra.mxu0 0.0
      %382 = vmatprep.subr.mxu0 0.0
      %383 = vmatpush1.msra.mxu0 0.0
      %384 = vmatprep.subr.mxu0 0.0
      %385 = vmatpush1.msra.mxu0 0.0
      %386 = vmatprep.subr.mxu0 0.0
      %387 = vmatpush1.msra.mxu0 0.0
      %388 = vmatprep.subr.mxu0 0.0
      %389 = vmatpush1.msra.mxu0 0.0
      %390 = vmatprep.subr.mxu0 0.0
      %391 = vmatpush1.msra.mxu0 0.0
      %392 = vmatprep.subr.mxu0 0.0
      %393 = vmatpush1.msra.mxu0 0.0
      %394 = vmatprep.subr.mxu0 0.0
      %395 = vmatpush1.msra.mxu0 0.0
      %396 = vmatprep.subr.mxu0 0.0
      %397 = vmatpush1.msra.mxu0 0.0
      %398 = vmatprep.subr.mxu0 0.0
      %399 = vmatpush1.msra.mxu0 0.0
      %400 = vmatprep.subr.mxu0 0.0
      %401 = vmatpush1.msra.mxu0 0.0
      %402 = vmatprep.subr.mxu0 0.0
      %403 = vmatpush1.msra.mxu0 0.0
      %404 = vmatprep.subr.mxu0 0.0
      %405 = vmatpush1.msra.mxu0 0.0
      %406 = vmatprep.subr.mxu0 0.0
      %407 = vmatpush1.msra.mxu0 0.0
      %408 = vmatprep.subr.mxu0 0.0
      %409 = vmatpush1.msra.mxu0 0.0
      %410 = vmatprep.mubr.f32.mxu0 0.0
      %411 = vmatmul.mubr.f32.gmra.mrb[0].mxu0 %v341
      %v412 = vpop.f32.mrb[0].mxu0
      %v413 = vadd.f32 0.0, %v412
      %v414 = vpop.f32.mrb[0].mxu0
      %415 = vdwg.mxu0
      %v417 = vsel %vm339, %v338, 0
      %v419 = vsel %vm343, %v160, 0
      %421 = vmatprep.subr.mxu0 0.0
      %422 = vmatpush1.msra.mxu0 %v419
      %423 = vmatprep.subr.mxu0 0.0
      %424 = vmatpush1.msra.mxu0 0.0
      %425 = vmatprep.subr.mxu0 0.0
      %426 = vmatpush1.msra.mxu0 0.0
      %427 = vmatprep.subr.mxu0 0.0
      %428 = vmatpush1.msra.mxu0 0.0
      %429 = vmatprep.subr.mxu0 0.0
      %430 = vmatpush1.msra.mxu0 0.0
      %431 = vmatprep.subr.mxu0 0.0
      %432 = vmatpush1.msra.mxu0 0.0
      %433 = vmatprep.subr.mxu0 0.0
      %434 = vmatpush1.msra.mxu0 0.0
      %435 = vmatprep.subr.mxu0 0.0
      %436 = vmatpush1.msra.mxu0 0.0
      %437 = vmatprep.subr.mxu0 0.0
      %438 = vmatpush1.msra.mxu0 0.0
      %439 = vmatprep.subr.mxu0 0.0
      %440 = vmatpush1.msra.mxu0 0.0
      %441 = vmatprep.subr.mxu0 0.0
      %442 = vmatpush1.msra.mxu0 0.0
      %443 = vmatprep.subr.mxu0 0.0
      %444 = vmatpush1.msra.mxu0 0.0
      %445 = vmatprep.subr.mxu0 0.0
      %446 = vmatpush1.msra.mxu0 0.0
      %447 = vmatprep.subr.mxu0 0.0
      %448 = vmatpush1.msra.mxu0 0.0
      %449 = vmatprep.subr.mxu0 0.0
      %450 = vmatpush1.msra.mxu0 0.0
      %451 = vmatprep.subr.mxu0 0.0
      %452 = vmatpush1.msra.mxu0 0.0
      %453 = vmatprep.subr.mxu0 0.0
      %454 = vmatpush1.msra.mxu0 0.0
      %455 = vmatprep.subr.mxu0 0.0
      %456 = vmatpush1.msra.mxu0 0.0
      %457 = vmatprep.subr.mxu0 0.0
      %458 = vmatpush1.msra.mxu0 0.0
      %459 = vmatprep.subr.mxu0 0.0
      %460 = vmatpush1.msra.mxu0 0.0
      %461 = vmatprep.subr.mxu0 0.0
      %462 = vmatpush1.msra.mxu0 0.0
      %463 = vmatprep.subr.mxu0 0.0
      %464 = vmatpush1.msra.mxu0 0.0
      %465 = vmatprep.subr.mxu0 0.0
      %466 = vmatpush1.msra.mxu0 0.0
      %467 = vmatprep.subr.mxu0 0.0
      %468 = vmatpush1.msra.mxu0 0.0
      %469 = vmatprep.subr.mxu0 0.0
      %470 = vmatpush1.msra.mxu0 0.0
      %471 = vmatprep.subr.mxu0 0.0
      %472 = vmatpush1.msra.mxu0 0.0
      %473 = vmatprep.subr.mxu0 0.0
      %474 = vmatpush1.msra.mxu0 0.0
      %475 = vmatprep.subr.mxu0 0.0
      %476 = vmatpush1.msra.mxu0 0.0
      %477 = vmatprep.subr.mxu0 0.0
      %478 = vmatpush1.msra.mxu0 0.0
      %479 = vmatprep.subr.mxu0 0.0
      %480 = vmatpush1.msra.mxu0 0.0
      %481 = vmatprep.subr.mxu0 0.0
      %482 = vmatpush1.msra.mxu0 0.0
      %483 = vmatprep.subr.mxu0 0.0
      %484 = vmatpush1.msra.mxu0 0.0
      %485 = vmatprep.mubr.f32.mxu0 0.0
      %486 = vmatmul.mubr.f32.gmra.mrb[0].mxu0 %v417
      %v487 = vpop.f32.mrb[0].mxu0
      %v488 = vadd.f32 0.0, %v487
      %v489 = vpop.f32.mrb[0].mxu0
      %490 = vdwg.mxu0
      %vm491 = vcmask 253952
      %492 = vst.msk [vmem:[%s158] sm:$0x1] %vm491, %v413
      %493 = vst.msk [vmem:[%s158 + $0x1] sm:$0x1] %vm491, %v488
      %p494 = scmp.lt.s32.totalorder %s13, 1
      %s495 = scalar_select %p494, %s13, 1
      %s496 = smul.addr %s495, 2
      %s497 = scalar_lea.vmem %s2, %s496
      // Predicated region
      $region29: #{pallas_forward.3} parent=27 // pred_check
        %p498 = pneg %p83
      $region30: #{pallas_forward.3} parent=27 // pred_check_branch
        %500 = sbr.rel (%p498) target = $region32
      $region31: #{pallas_forward.3} parent=27 // pred_region
        _
      $region32: #{pallas_forward.3} parent=27 // pred_fallthru
        _
    $region28: #{pallas_forward.3} parent=5 // pred_fallthru
      _
    %p501 = scmp.le.s32.totalorder 2, %s8
    // Predicated region
    $region33: #{pallas_forward.3} parent=5 // pred_check
      %p502 = pneg %p501
    $region34: #{pallas_forward.3} parent=5 // pred_check_branch
      %504 = sbr.rel (%p502) target = $region36
    $region35: #{pallas_forward.3} parent=5 // pred_region
      %s505 = ssub.s32 %s8, 2
      // Predicated region
      $region37: #{pallas_forward.3} parent=35 // pred_check
        %p506 = pneg %p89
      $region38: #{pallas_forward.3} parent=35 // pred_check_branch
        %508 = sbr.rel (%p506) target = $region40
      $region39: #{pallas_forward.3} parent=35 // pred_region
        %p509 = scmp.lt.s32.totalorder %s14, 1
        %s510 = scalar_select %p509, %s14, 1
        %s511 = smul.addr %s510, 2
        %s512 = scalar_lea.vmem %s2, %s511
      $region40: #{pallas_forward.3} parent=35 // pred_fallthru
        _
    $region36: #{pallas_forward.3} parent=5 // pred_fallthru
      _
  $region6: #{pallas_forward.3} parent=0 // loop_footer
    %s12 = sadd.s32 1, %s8
  $region7: #{pallas_forward.3} parent=0 // loop_footer_branch
    %7 = sbr.rel target = $region3
  $region8: #{pallas_forward.3} parent=0 // loop_exit
    _

// kernel: pallas_forward.2
$region0: #{pallas_forward.2}
  #allocation0 [shape = 'u32[]', space=smem, size = 0x4, offset = 0x4, fixed_abs, tag = 'smem constant byte address 0x4 - core index']
  #allocation1 [shape = 'u32[144,128]{1,0:T(1,128)}', space=vmem, size = 0x12000, scoped, tag = 'internal scratch']
  %s0 = inlined_call_operand.vmem [shape: bf16[2,128,96], index: 0, kind: input, shape index: {}]
  %s1 = inlined_call_operand.vmem [shape: f32[2,8,1,32], index: 1, kind: input, shape index: {}]
  %s2 = inlined_call_operand.vmem [shape: bf16[2,96,32], index: 2, kind: input, shape index: {}]
  %s3 = inlined_call_operand.vmem [shape: f32[2,1,32], index: 3, kind: input, shape index: {}]
  %s4 = inlined_call_operand.vmem [shape: f32[2,8,1,32], index: 4, kind: output, shape index: {}]
  %s5 = sld [smem:[#allocation0]]
  $region49: #{pallas_forward.2} parent=0
    _
  %s7 = ssub.s32 1, %s5
  %s8 = scalar_select 0, %s7, %s5
  loop: start=0, step=1, limit=4
  $region2: #{pallas_forward.2} parent=0 // loop_pre_header
    _
  $region3: #{pallas_forward.2} parent=0 // loop_header
    %s10 = sphi 0, %s14
    %p11 = scmp.ge.s32.totalorder %s10, 4
    %s17 = sphi 0, %s29
    %s18 = sphi 0, %s25
    %s19 = sphi 0, %s17
    %s20 = sphi 0, %s18
    %s21 = sphi 0, %s19
    %s22 = sphi 0, %s20
    %s34 = sphi 0, %s36
    %s37 = sphi 0, %s34
    %s38 = sphi 0, %s37
    %s54 = sphi 0, %s38
    %s62 = sphi 0, %s64
    %s65 = sphi 0, %s62
    %s66 = sphi 0, %s65
    %s82 = sphi 0, %s66
    %s88 = sphi 0, %s90
    %s91 = sphi 0, %s88
    %s92 = sphi 0, %s91
    %s108 = sphi 0, %s92
    %s114 = sphi 0, %s116
    %s117 = sphi 0, %s114
    %s118 = sphi 0, %s117
    %s134 = sphi 0, %s118
    %s142 = sphi 0, %s144
    %s145 = sphi 0, %s142
    %s146 = sphi 0, %s145
    %s162 = sphi 0, %s146
  $region4: #{pallas_forward.2} parent=0 // loop_header_branch
    %13 = sbr.rel (%p11) target = $region8
  $region5: #{pallas_forward.2} parent=0 // loop_body
    %s15 = ssub.s32 %s10, 1
    %s16 = ssub.s32 %s10, 2
    %s23 = sadd.s32 1, %s18
    %p24 = scmp.ge.s32.totalorder %s23, 1
    %s25 = scalar_select %p24, 0, %s23
    %s26 = sadd.s32 1, %s17
    %s27 = scalar_select %p24, %s26, %s17
    %p28 = scmp.ge.s32.totalorder %s27, 2
    %s29 = scalar_select %p28, 0, %s27
    %s30 = ssub.s32 %s17, %s29
    %s31 = ssub.s32 %s18, %s25
    %s32 = sor.u32 %s30, %s31
    %p33 = scmp.eq.s32.totalorder %s32, 0
    %s35 = sadd.s32 %s34, 1
    %s36 = scalar_select %p33, %s34, %s35
    %p39 = pneg %p33
    %p40 = scmp.eq.s32.totalorder %s10, 1
    %p41 = por %p39, %p40
    %p42 = scmp.ne.s32.totalorder %s34, %s37
    %p43 = scmp.eq.s32.totalorder %s10, 0
    %p44 = por %p42, %p43
    %p45 = scmp.ne.s32.totalorder %s34, %s37
    %p46 = scmp.eq.s32.totalorder %s15, 1
    %p47 = por %p45, %p46
    %p48 = scmp.ne.s32.totalorder %s37, %s38
    %p49 = scmp.eq.s32.totalorder %s15, 0
    %p50 = por %p48, %p49
    %p51 = scmp.ne.s32.totalorder %s37, %s38
    %p52 = scmp.eq.s32.totalorder %s16, 1
    %p53 = por %p51, %p52
    %p55 = scmp.ne.s32.totalorder %s38, %s54
    %p56 = scmp.eq.s32.totalorder %s16, 0
    %p57 = por %p55, %p56
    %s58 = ssub.s32 %s17, %s29
    %s59 = ssub.s32 %s18, %s25
    %s60 = sor.u32 %s58, %s59
    %p61 = scmp.eq.s32.totalorder %s60, 0
    %s63 = sadd.s32 %s62, 1
    %s64 = scalar_select %p61, %s62, %s63
    %p67 = pneg %p61
    %p68 = scmp.eq.s32.totalorder %s10, 1
    %p69 = por %p67, %p68
    %p70 = scmp.ne.s32.totalorder %s62, %s65
    %p71 = scmp.eq.s32.totalorder %s10, 0
    %p72 = por %p70, %p71
    %p73 = scmp.ne.s32.totalorder %s62, %s65
    %p74 = scmp.eq.s32.totalorder %s15, 1
    %p75 = por %p73, %p74
    %p76 = scmp.ne.s32.totalorder %s65, %s66
    %p77 = scmp.eq.s32.totalorder %s15, 0
    %p78 = por %p76, %p77
    %p79 = scmp.ne.s32.totalorder %s65, %s66
    %p80 = scmp.eq.s32.totalorder %s16, 1
    %p81 = por %p79, %p80
    %p83 = scmp.ne.s32.totalorder %s66, %s82
    %p84 = scmp.eq.s32.totalorder %s16, 0
    %p85 = por %p83, %p84
    %s86 = ssub.s32 %s17, %s29
    %p87 = scmp.eq.s32.totalorder %s86, 0
    %s89 = sadd.s32 %s88, 1
    %s90 = scalar_select %p87, %s88, %s89
    %p93 = pneg %p87
    %p94 = scmp.eq.s32.totalorder %s10, 1
    %p95 = por %p93, %p94
    %p96 = scmp.ne.s32.totalorder %s88, %s91
    %p97 = scmp.eq.s32.totalorder %s10, 0
    %p98 = por %p96, %p97
    %p99 = scmp.ne.s32.totalorder %s88, %s91
    %p100 = scmp.eq.s32.totalorder %s15, 1
    %p101 = por %p99, %p100
    %p102 = scmp.ne.s32.totalorder %s91, %s92
    %p103 = scmp.eq.s32.totalorder %s15, 0
    %p104 = por %p102, %p103
    %p105 = scmp.ne.s32.totalorder %s91, %s92
    %p106 = scmp.eq.s32.totalorder %s16, 1
    %p107 = por %p105, %p106
    %p109 = scmp.ne.s32.totalorder %s92, %s108
    %p110 = scmp.eq.s32.totalorder %s16, 0
    %p111 = por %p109, %p110
    %s112 = ssub.s32 %s17, %s29
    %p113 = scmp.eq.s32.totalorder %s112, 0
    %s115 = sadd.s32 %s114, 1
    %s116 = scalar_select %p113, %s114, %s115
    %p119 = pneg %p113
    %p120 = scmp.eq.s32.totalorder %s10, 1
    %p121 = por %p119, %p120
    %p122 = scmp.ne.s32.totalorder %s114, %s117
    %p123 = scmp.eq.s32.totalorder %s10, 0
    %p124 = por %p122, %p123
    %p125 = scmp.ne.s32.totalorder %s114, %s117
    %p126 = scmp.eq.s32.totalorder %s15, 1
    %p127 = por %p125, %p126
    %p128 = scmp.ne.s32.totalorder %s117, %s118
    %p129 = scmp.eq.s32.totalorder %s15, 0
    %p130 = por %p128, %p129
    %p131 = scmp.ne.s32.totalorder %s117, %s118
    %p132 = scmp.eq.s32.totalorder %s16, 1
    %p133 = por %p131, %p132
    %p135 = scmp.ne.s32.totalorder %s118, %s134
    %p136 = scmp.eq.s32.totalorder %s16, 0
    %p137 = por %p135, %p136
    %s138 = ssub.s32 %s17, %s29
    %s139 = ssub.s32 %s18, %s25
    %s140 = sor.u32 %s138, %s139
    %p141 = scmp.eq.s32.totalorder %s140, 0
    %s143 = sadd.s32 %s142, 1
    %s144 = scalar_select %p141, %s142, %s143
    %p147 = pneg %p141
    %p148 = scmp.eq.s32.totalorder %s10, 1
    %p149 = por %p147, %p148
    %p150 = scmp.ne.s32.totalorder %s142, %s145
    %p151 = scmp.eq.s32.totalorder %s10, 0
    %p152 = por %p150, %p151
    %p153 = scmp.ne.s32.totalorder %s142, %s145
    %p154 = scmp.eq.s32.totalorder %s15, 1
    %p155 = por %p153, %p154
    %p156 = scmp.ne.s32.totalorder %s145, %s146
    %p157 = scmp.eq.s32.totalorder %s15, 0
    %p158 = por %p156, %p157
    %p159 = scmp.ne.s32.totalorder %s145, %s146
    %p160 = scmp.eq.s32.totalorder %s16, 1
    %p161 = por %p159, %p160
    %p163 = scmp.ne.s32.totalorder %s146, %s162
    %p164 = scmp.eq.s32.totalorder %s16, 0
    %p165 = por %p163, %p164
    %p166 = scmp.le.s32.totalorder 1, %s10
    %p167 = scmp.lt.s32.totalorder %s10, 3
    %p168 = pnand %p166, %p167
    %p169 = pneg %p168
    // Predicated region
    $region9: #{pallas_forward.2} parent=5 // pred_check
      _
    $region10: #{pallas_forward.2} parent=5 // pred_check_branch
      %171 = sbr.rel (%p168) target = $region12
    $region11: #{pallas_forward.2} parent=5 // pred_region
      %s172 = ssub.s32 %s10, 1
    $region12: #{pallas_forward.2} parent=5 // pred_fallthru
      _
    %p173 = scmp.lt.s32.totalorder %s10, 2
    // Predicated region
    $region13: #{pallas_forward.2} parent=5 // pred_check
      %p174 = pneg %p173
    $region14: #{pallas_forward.2} parent=5 // pred_check_branch
      %176 = sbr.rel (%p174) target = $region16
    $region15: #{pallas_forward.2} parent=5 // pred_region
      // Predicated region
      $region17: #{pallas_forward.2} parent=15 // pred_check
        %p177 = pneg %p44
      $region18: #{pallas_forward.2} parent=15 // pred_check_branch
        %179 = sbr.rel (%p177) target = $region20
      $region19: #{pallas_forward.2} parent=15 // pred_region
        %s180 = smul.u32 16, %s18
        %p181 = scmp.lt.s32.totalorder %s17, 1
        %s182 = scalar_select %p181, %s17, 1
        %p183 = scmp.lt.s32.totalorder %s180, 15
        %s184 = scalar_select %p183, %s180, 15
        %s185 = smul.addr %s182, 16
        %s186 = sadd.s32 %s184, %s185
        %s187 = smul.addr %s186, 4
        %s188 = scalar_lea.vmem %s0, %s187
        %s189 = smul.u32 16, %s18
      $region20: #{pallas_forward.2} parent=15 // pred_fallthru
        _
      // Predicated region
      $region21: #{pallas_forward.2} parent=15 // pred_check
        %p190 = pneg %p72
      $region22: #{pallas_forward.2} parent=15 // pred_check_branch
        %192 = sbr.rel (%p190) target = $region24
      $region23: #{pallas_forward.2} parent=15 // pred_region
        %s193 = smul.u32 8, %s18
        %p194 = scmp.lt.s32.totalorder %s17, 1
        %s195 = scalar_select %p194, %s17, 1
        %p196 = scmp.lt.s32.totalorder %s193, 7
        %s197 = scalar_select %p196, %s193, 7
        %s198 = smul.addr %s195, 8
        %s199 = sadd.s32 %s197, %s198
        %s200 = scalar_lea.vmem %s1, %s199
        %s201 = smul.u32 8, %s18
      $region24: #{pallas_forward.2} parent=15 // pred_fallthru
        _
      // Predicated region
      $region25: #{pallas_forward.2} parent=15 // pred_check
        %p202 = pneg %p98
      $region26: #{pallas_forward.2} parent=15 // pred_check_branch
        %204 = sbr.rel (%p202) target = $region28
      $region27: #{pallas_forward.2} parent=15 // pred_region
        %p205 = scmp.lt.s32.totalorder %s17, 1
        %s206 = scalar_select %p205, %s17, 1
        %s207 = smul.addr %s206, 12
        %s208 = smul.addr %s207, 4
        %s209 = scalar_lea.vmem %s2, %s208
      $region28: #{pallas_forward.2} parent=15 // pred_fallthru
        _
      // Predicated region
      $region29: #{pallas_forward.2} parent=15 // pred_check
        %p210 = pneg %p124
      $region30: #{pallas_forward.2} parent=15 // pred_check_branch
        %212 = sbr.rel (%p210) target = $region32
      $region31: #{pallas_forward.2} parent=15 // pred_region
        %p213 = scmp.lt.s32.totalorder %s17, 1
        %s214 = scalar_select %p213, %s17, 1
        %s215 = scalar_lea.vmem %s3, %s214
      $region32: #{pallas_forward.2} parent=15 // pred_fallthru
        _
    $region16: #{pallas_forward.2} parent=5 // pred_fallthru
      _
    %p216 = scmp.le.s32.totalorder 1, %s10
    %p217 = scmp.lt.s32.totalorder %s10, 3
    %p218 = pnand %p216, %p217
    %p219 = pneg %p218
    // Predicated region
    $region33: #{pallas_forward.2} parent=5 // pred_check
      _
    $region34: #{pallas_forward.2} parent=5 // pred_check_branch
      %221 = sbr.rel (%p218) target = $region36
    $region35: #{pallas_forward.2} parent=5 // pred_region
      %s222 = ssub.s32 %s10, 1
      %s223 = smul.u32 16, %s20
      %p224 = scmp.lt.s32.totalorder %s19, 1
      %s225 = scalar_select %p224, %s19, 1
      %p226 = scmp.lt.s32.totalorder %s223, 15
      %s227 = scalar_select %p226, %s223, 15
      %s228 = smul.addr %s225, 16
      %s229 = sadd.s32 %s227, %s228
      %s230 = smul.addr %s229, 4
      %s231 = scalar_lea.vmem %s0, %s230
      %p232 = pneg %p50
      %p233 = pneg %p47
      %s234 = smul.u32 8, %s20
      %p235 = scmp.lt.s32.totalorder %s19, 1
      %s236 = scalar_select %p235, %s19, 1
      %p237 = scmp.lt.s32.totalorder %s234, 7
      %s238 = scalar_select %p237, %s234, 7
      %s239 = smul.addr %s236, 8
      %s240 = sadd.s32 %s238, %s239
      %s241 = scalar_lea.vmem %s1, %s240
      %p242 = pneg %p78
      %p243 = pneg %p75
      %p244 = scmp.lt.s32.totalorder %s19, 1
      %s245 = scalar_select %p244, %s19, 1
      %s246 = smul.addr %s245, 12
      %s247 = smul.addr %s246, 4
      %s248 = scalar_lea.vmem %s2, %s247
      %p249 = pneg %p104
      %p250 = pneg %p101
      %p251 = scmp.lt.s32.totalorder %s19, 1
      %s252 = scalar_select %p251, %s19, 1
      %s253 = scalar_lea.vmem %s3, %s252
      %p254 = pneg %p130
      %p255 = pneg %p127
      %p256 = pneg %p158
      %p257 = pneg %p155
      %s258 = smul.u32 8, %s20
      %p259 = scmp.lt.s32.totalorder %s19, 1
      %s260 = scalar_select %p259, %s19, 1
      %p261 = scmp.lt.s32.totalorder %s258, 7
      %s262 = scalar_select %p261, %s258, 7
      %s263 = smul.addr %s260, 8
      %s264 = sadd.s32 %s262, %s263
      %s265 = scalar_lea.vmem %s4, %s264
      %s266 = smul.u32 16, %s20
      %p267 = scmp.lt.s32.totalorder %s19, 1
      %s268 = scalar_select %p267, %s19, 1
      %p269 = scmp.lt.s32.totalorder %s266, 15
      %s270 = scalar_select %p269, %s266, 15
      %s271 = smul.addr %s268, 16
      %s272 = sadd.s32 %s270, %s271
      %s273 = smul.addr %s272, 4
      %s274 = scalar_lea.vmem %s0, %s273
      %s275 = smul.u32 16, %s20
      %s276 = smul.u32 8, %s20
      %p277 = scmp.lt.s32.totalorder %s19, 1
      %s278 = scalar_select %p277, %s19, 1
      %p279 = scmp.lt.s32.totalorder %s276, 7
      %s280 = scalar_select %p279, %s276, 7
      %s281 = smul.addr %s278, 8
      %s282 = sadd.s32 %s280, %s281
      %s283 = scalar_lea.vmem %s1, %s282
      %s284 = smul.u32 8, %s20
      %p285 = scmp.lt.s32.totalorder %s19, 1
      %s286 = scalar_select %p285, %s19, 1
      %s287 = smul.addr %s286, 12
      %s288 = smul.addr %s287, 4
      %s289 = scalar_lea.vmem %s2, %s288
      %p290 = scmp.lt.s32.totalorder %s19, 1
      %s291 = scalar_select %p290, %s19, 1
      %s292 = scalar_lea.vmem %s3, %s291
      %s293 = smul.u32 8, %s20
      %p294 = scmp.lt.s32.totalorder %s19, 1
      %s295 = scalar_select %p294, %s19, 1
      %p296 = scmp.lt.s32.totalorder %s293, 7
      %s297 = scalar_select %p296, %s293, 7
      %s298 = smul.addr %s295, 8
      %s299 = sadd.s32 %s297, %s298
      %s300 = scalar_lea.vmem %s4, %s299
      %s301 = smul.u32 8, %s20
      %v303 = vld [vmem:[%s274] sm:$0xf]
      %v304 = vld [vmem:[%s274 + $0x4] sm:$0xf]
      %v305 = vld [vmem:[%s274 + $0x8] sm:$0xf]
      %v306 = vld [vmem:[%s274 + $0xc] sm:$0xf]
      %v307 = vld [vmem:[%s274 + $0x10] sm:$0xf]
      %v308 = vld [vmem:[%s274 + $0x14] sm:$0xf]
      %v309 = vld [vmem:[%s274 + $0x18] sm:$0xf]
      %v310 = vld [vmem:[%s274 + $0x1c] sm:$0xf]
      %v311 = vld [vmem:[%s274 + $0x20] sm:$0xf]
      %v312 = vld [vmem:[%s274 + $0x24] sm:$0xf]
      %v313 = vld [vmem:[%s274 + $0x28] sm:$0xf]
      %v314 = vld [vmem:[%s274 + $0x2c] sm:$0xf]
      %v315 = vld [vmem:[%s274 + $0x30] sm:$0xf]
      %v316 = vld [vmem:[%s274 + $0x34] sm:$0xf]
      %v317 = vld [vmem:[%s274 + $0x38] sm:$0xf]
      %v318 = vld [vmem:[%s274 + $0x3c] sm:$0xf]
      %v319 = vld [vmem:[%s289] sm:$0xf]
      %v320 = vld [vmem:[%s289 + $0x4] sm:$0xf]
      %v321 = vld [vmem:[%s289 + $0x8] sm:$0xf]
      %v322 = vld [vmem:[%s289 + $0xc] sm:$0xf]
      %v323 = vld [vmem:[%s289 + $0x10] sm:$0xf]
      %v324 = vld [vmem:[%s289 + $0x14] sm:$0xf]
      %v325 = vld [vmem:[%s289 + $0x18] sm:$0xf]
      %v326 = vld [vmem:[%s289 + $0x1c] sm:$0xf]
      %v327 = vld [vmem:[%s289 + $0x20] sm:$0xf]
      %v328 = vld [vmem:[%s289 + $0x24] sm:$0xf]
      %v329 = vld [vmem:[%s289 + $0x28] sm:$0xf]
      %v330 = vld [vmem:[%s289 + $0x2c] sm:$0xf]
      %v331 = vld [vmem:[%s292] sm:$0x1]
      %v333 = vlaneseq
      %v334 = vshrl.u32 %v333, 7
      %v335 = vsub.s32 0, %v334
      %v336 = vrot.slane %v331, %v335
      %v354 = vunpack.c.l.b16 %v303
      %v355 = vunpack.c.l.b16 %v304
      %v356 = vunpack.c.l.b16 %v305
      %v357 = vunpack.c.l.b16 %v306
      %v358 = vunpack.c.l.b16 %v307
      %v359 = vunpack.c.l.b16 %v308
      %v360 = vunpack.c.l.b16 %v309
      %v361 = vunpack.c.l.b16 %v310
      %v362 = vunpack.c.l.b16 %v311
      %v363 = vunpack.c.l.b16 %v312
      %v364 = vunpack.c.l.b16 %v313
      %v365 = vunpack.c.l.b16 %v314
      %v366 = vunpack.c.l.b16 %v315
      %v367 = vunpack.c.l.b16 %v316
      %v368 = vunpack.c.l.b16 %v317
      %v369 = vunpack.c.l.b16 %v318
      %v370 = vpack.c.b16 %v355, %v354
      %v371 = vpack.c.b16 %v357, %v356
      %v372 = vpack.c.b16 %v359, %v358
      %v373 = vpack.c.b16 %v361, %v360
      %v374 = vpack.c.b16 %v363, %v362
      %v375 = vpack.c.b16 %v365, %v364
      %v376 = vpack.c.b16 %v367, %v366
      %v377 = vpack.c.b16 %v369, %v368
      %v390 = vunpack.c.l.b16 %v319
      %v391 = vunpack.c.l.b16 %v320
      %v392 = vunpack.c.l.b16 %v321
      %v393 = vunpack.c.l.b16 %v322
      %v394 = vunpack.c.l.b16 %v323
      %v395 = vunpack.c.l.b16 %v324
      %v396 = vunpack.c.l.b16 %v325
      %v397 = vunpack.c.l.b16 %v326
      %v398 = vunpack.c.l.b16 %v327
      %v399 = vunpack.c.l.b16 %v328
      %v400 = vunpack.c.l.b16 %v329
      %v401 = vunpack.c.l.b16 %v330
      %v402 = vpack.c.b16 %v391, %v390
      %v403 = vpack.c.b16 %v393, %v392
      %v404 = vpack.c.b16 %v395, %v394
      %v405 = vpack.c.b16 %v397, %v396
      %v406 = vpack.c.b16 %v399, %v398
      %v407 = vpack.c.b16 %v401, %v400
      %vm414 = vcmask 785408
      %v416 = vsel %vm414, %v370, 0
      %v419 = vsel %vm414, %v371, 0
      %v422 = vsel %vm414, %v372, 0
      %v425 = vsel %vm414, %v373, 0
      %v428 = vsel %vm414, %v374, 0
      %v431 = vsel %vm414, %v375, 0
      %v434 = vsel %vm414, %v376, 0
      %v437 = vsel %vm414, %v377, 0
      %439 = vmatprep.subr.bf16.mxu0 0
      %440 = vmatpush1.bf16.msra.mxu0 %v402
      %441 = vmatprep.subr.bf16.mxu0 0
      %442 = vmatpush1.bf16.msra.mxu0 %v403
      %443 = vmatprep.subr.bf16.mxu0 0
      %444 = vmatpush1.bf16.msra.mxu0 %v404
      %445 = vmatprep.subr.bf16.mxu0 0
      %446 = vmatpush1.bf16.msra.mxu0 %v405
      %447 = vmatprep.subr.bf16.mxu0 0
      %448 = vmatpush1.bf16.msra.mxu0 %v406
      %449 = vmatprep.subr.bf16.mxu0 0
      %450 = vmatpush1.bf16.msra.mxu0 %v407
      %451 = vmatprep.subr.bf16.mxu0 0
      %452 = vmatpush1.bf16.msra.mxu0 0
      %453 = vmatprep.subr.bf16.mxu0 0
      %454 = vmatpush1.bf16.msra.mxu0 0
      %455 = vmatprep.subr.bf16.mxu0 0
      %456 = vmatpush1.bf16.msra.mxu0 0
      %457 = vmatprep.subr.bf16.mxu0 0
      %458 = vmatpush1.bf16.msra.mxu0 0
      %459 = vmatprep.subr.bf16.mxu0 0
      %460 = vmatpush1.bf16.msra.mxu0 0
      %461 = vmatprep.subr.bf16.mxu0 0
      %462 = vmatpush1.bf16.msra.mxu0 0
      %463 = vmatprep.subr.bf16.mxu0 0
      %464 = vmatpush1.bf16.msra.mxu0 0
      %465 = vmatprep.subr.bf16.mxu0 0
      %466 = vmatpush1.bf16.msra.mxu0 0
      %467 = vmatprep.subr.bf16.mxu0 0
      %468 = vmatpush1.bf16.msra.mxu0 0
      %469 = vmatprep.subr.bf16.mxu0 0
      %470 = vmatpush1.bf16.msra.mxu0 0
      %471 = vmatprep.mubr.bf16.mxu0 0
      %472 = vmatmul.mubr.bf16.gmra.mrb[0].mxu0 %v416
      %v473 = vpop.f32.mrb[0].mxu0
      %v474 = vadd.f32 %v336, %v473
      %v475 = vpop.f32.mrb[0].mxu0
      %v476 = vpop.f32.mrb[0].mxu0
      %v477 = vadd.f32 %v336, %v476
      %v478 = vpop.f32.mrb[0].mxu0
      %479 = vmatprep.mubr.bf16.mxu0 0
      %480 = vmatmul.mubr.bf16.gmra.mrb[0].mxu0 %v419
      %v481 = vpop.f32.mrb[0].mxu0
      %v482 = vadd.f32 %v336, %v481
      %v483 = vpop.f32.mrb[0].mxu0
      %v484 = vpop.f32.mrb[0].mxu0
      %v485 = vadd.f32 %v336, %v484
      %v486 = vpop.f32.mrb[0].mxu0
      %487 = vmatprep.mubr.bf16.mxu0 0
      %488 = vmatmul.mubr.bf16.gmra.mrb[0].mxu0 %v422
      %v489 = vpop.f32.mrb[0].mxu0
      %v490 = vadd.f32 %v336, %v489
      %v491 = vpop.f32.mrb[0].mxu0
      %v492 = vpop.f32.mrb[0].mxu0
      %v493 = vadd.f32 %v336, %v492
      %v494 = vpop.f32.mrb[0].mxu0
      %495 = vmatprep.mubr.bf16.mxu0 0
      %496 = vmatmul.mubr.bf16.gmra.mrb[0].mxu0 %v425
      %v497 = vpop.f32.mrb[0].mxu0
      %v498 = vadd.f32 %v336, %v497
      %v499 = vpop.f32.mrb[0].mxu0
      %v500 = vpop.f32.mrb[0].mxu0
      %v501 = vadd.f32 %v336, %v500
      %v502 = vpop.f32.mrb[0].mxu0
      %503 = vmatprep.mubr.bf16.mxu0 0
      %504 = vmatmul.mubr.bf16.gmra.mrb[0].mxu0 %v428
      %v505 = vpop.f32.mrb[0].mxu0
      %v506 = vadd.f32 %v336, %v505
      %v507 = vpop.f32.mrb[0].mxu0
      %v508 = vpop.f32.mrb[0].mxu0
      %v509 = vadd.f32 %v336, %v508
      %v510 = vpop.f32.mrb[0].mxu0
      %511 = vmatprep.mubr.bf16.mxu0 0
      %512 = vmatmul.mubr.bf16.gmra.mrb[0].mxu0 %v431
      %v513 = vpop.f32.mrb[0].mxu0
      %v514 = vadd.f32 %v336, %v513
      %v515 = vpop.f32.mrb[0].mxu0
      %v516 = vpop.f32.mrb[0].mxu0
      %v517 = vadd.f32 %v336, %v516
      %v518 = vpop.f32.mrb[0].mxu0
      %519 = vmatprep.mubr.bf16.mxu0 0
      %520 = vmatmul.mubr.bf16.gmra.mrb[0].mxu0 %v434
      %v521 = vpop.f32.mrb[0].mxu0
      %v522 = vadd.f32 %v336, %v521
      %v523 = vpop.f32.mrb[0].mxu0
      %v524 = vpop.f32.mrb[0].mxu0
      %v525 = vadd.f32 %v336, %v524
      %v526 = vpop.f32.mrb[0].mxu0
      %527 = vmatprep.mubr.bf16.mxu0 0
      %528 = vmatmul.mubr.bf16.gmra.mrb[0].mxu0 %v437
      %v529 = vpop.f32.mrb[0].mxu0
      %v530 = vadd.f32 %v336, %v529
      %v531 = vpop.f32.mrb[0].mxu0
      %v532 = vpop.f32.mrb[0].mxu0
      %v533 = vadd.f32 %v336, %v532
      %v534 = vpop.f32.mrb[0].mxu0
      %535 = vdwg.mxu0
      %v536 = vmax.f32 %v474, 0.0
      %v537 = vmax.f32 %v477, 0.0
      %v538 = vmax.f32 %v482, 0.0
      %v539 = vmax.f32 %v485, 0.0
      %v540 = vmax.f32 %v490, 0.0
      %v541 = vmax.f32 %v493, 0.0
      %v542 = vmax.f32 %v498, 0.0
      %v543 = vmax.f32 %v501, 0.0
      %v544 = vmax.f32 %v506, 0.0
      %v545 = vmax.f32 %v509, 0.0
      %v546 = vmax.f32 %v514, 0.0
      %v547 = vmax.f32 %v517, 0.0
      %v548 = vmax.f32 %v522, 0.0
      %v549 = vmax.f32 %v525, 0.0
      %v550 = vmax.f32 %v530, 0.0
      %v551 = vmax.f32 %v533, 0.0
      %v552 = vld [vmem:[%s283] sm:$0x1]
      %v553 = vld [vmem:[%s283 + $0x1] sm:$0x1]
      %v554 = vld [vmem:[%s283 + $0x2] sm:$0x1]
      %v555 = vld [vmem:[%s283 + $0x3] sm:$0x1]
      %v556 = vld [vmem:[%s283 + $0x4] sm:$0x1]
      %v557 = vld [vmem:[%s283 + $0x5] sm:$0x1]
      %v558 = vld [vmem:[%s283 + $0x6] sm:$0x1]
      %v559 = vld [vmem:[%s283 + $0x7] sm:$0x1]
      %vm560 = vcmask 261120
      %v562 = vsel %vm560, %v552, 0
      %v565 = vsel %vm560, %v536, 0
      %v568 = vsel %vm560, %v537, 0
      %570 = vmatprep.subr.mxu0 0.0
      %571 = vmatpush1.xpose.msra.mxu0 %v565
      %572 = vmatprep.subr.mxu0 0.0
      %573 = vmatpush1.xpose.msra.mxu0 %v568
      %574 = vmatprep.subr.mxu0 0.0
      %575 = vmatpush1.xpose.msra.mxu0 0.0
      %576 = vmatprep.subr.mxu0 0.0
      %577 = vmatpush1.xpose.msra.mxu0 0.0
      %578 = vmatprep.subr.mxu0 0.0
      %579 = vmatpush1.xpose.msra.mxu0 0.0
      %580 = vmatprep.subr.mxu0 0.0
      %581 = vmatpush1.xpose.msra.mxu0 0.0
      %582 = vmatprep.subr.mxu0 0.0
      %583 = vmatpush1.xpose.msra.mxu0 0.0
      %584 = vmatprep.subr.mxu0 0.0
      %585 = vmatpush1.xpose.msra.mxu0 0.0
      %586 = vmatprep.subr.mxu0 0.0
      %587 = vmatpush1.xpose.msra.mxu0 0.0
      %588 = vmatprep.subr.mxu0 0.0
      %589 = vmatpush1.xpose.msra.mxu0 0.0
      %590 = vmatprep.subr.mxu0 0.0
      %591 = vmatpush1.xpose.msra.mxu0 0.0
      %592 = vmatprep.subr.mxu0 0.0
      %593 = vmatpush1.xpose.msra.mxu0 0.0
      %594 = vmatprep.subr.mxu0 0.0
      %595 = vmatpush1.xpose.msra.mxu0 0.0
      %596 = vmatprep.subr.mxu0 0.0
      %597 = vmatpush1.xpose.msra.mxu0 0.0
      %598 = vmatprep.subr.mxu0 0.0
      %599 = vmatpush1.xpose.msra.mxu0 0.0
      %600 = vmatprep.subr.mxu0 0.0
      %601 = vmatpush1.xpose.msra.mxu0 0.0
      %602 = vmatprep.subr.mxu0 0.0
      %603 = vmatpush1.xpose.msra.mxu0 0.0
      %604 = vmatprep.subr.mxu0 0.0
      %605 = vmatpush1.xpose.msra.mxu0 0.0
      %606 = vmatprep.subr.mxu0 0.0
      %607 = vmatpush1.xpose.msra.mxu0 0.0
      %608 = vmatprep.subr.mxu0 0.0
      %609 = vmatpush1.xpose.msra.mxu0 0.0
      %610 = vmatprep.subr.mxu0 0.0
      %611 = vmatpush1.xpose.msra.mxu0 0.0
      %612 = vmatprep.subr.mxu0 0.0
      %613 = vmatpush1.xpose.msra.mxu0 0.0
      %614 = vmatprep.subr.mxu0 0.0
      %615 = vmatpush1.xpose.msra.mxu0 0.0
      %616 = vmatprep.subr.mxu0 0.0
      %617 = vmatpush1.xpose.msra.mxu0 0.0
      %618 = vmatprep.subr.mxu0 0.0
      %619 = vmatpush1.xpose.msra.mxu0 0.0
      %620 = vmatprep.subr.mxu0 0.0
      %621 = vmatpush1.xpose.msra.mxu0 0.0
      %622 = vmatprep.subr.mxu0 0.0
      %623 = vmatpush1.xpose.msra.mxu0 0.0
      %624 = vmatprep.subr.mxu0 0.0
      %625 = vmatpush1.xpose.msra.mxu0 0.0
      %626 = vmatprep.subr.mxu0 0.0
      %627 = vmatpush1.xpose.msra.mxu0 0.0
      %628 = vmatprep.subr.mxu0 0.0
      %629 = vmatpush1.xpose.msra.mxu0 0.0
      %630 = vmatprep.subr.mxu0 0.0
      %631 = vmatpush1.xpose.msra.mxu0 0.0
      %632 = vmatprep.subr.mxu0 0.0
      %633 = vmatpush1.xpose.msra.mxu0 0.0
      %634 = vmatprep.mubr.f32.mxu0 0.0
      %635 = vmatmul.mubr.f32.gmra.mrb[0].mxu0 %v562
      %v636 = vpop.f32.mrb[0].mxu0
      %v637 = vadd.f32 0.0, %v636
      %v638 = vpop.f32.mrb[0].mxu0
      %639 = vdwg.mxu0
      %v641 = vsel %vm560, %v553, 0
      %v644 = vsel %vm560, %v538, 0
      %v647 = vsel %vm560, %v539, 0
      %649 = vmatprep.subr.mxu0 0.0
      %650 = vmatpush1.xpose.msra.mxu0 %v644
      %651 = vmatprep.subr.mxu0 0.0
      %652 = vmatpush1.xpose.msra.mxu0 %v647
      %653 = vmatprep.subr.mxu0 0.0
      %654 = vmatpush1.xpose.msra.mxu0 0.0
      %655 = vmatprep.subr.mxu0 0.0
      %656 = vmatpush1.xpose.msra.mxu0 0.0
      %657 = vmatprep.subr.mxu0 0.0
      %658 = vmatpush1.xpose.msra.mxu0 0.0
      %659 = vmatprep.subr.mxu0 0.0
      %660 = vmatpush1.xpose.msra.mxu0 0.0
      %661 = vmatprep.subr.mxu0 0.0
      %662 = vmatpush1.xpose.msra.mxu0 0.0
      %663 = vmatprep.subr.mxu0 0.0
      %664 = vmatpush1.xpose.msra.mxu0 0.0
      %665 = vmatprep.subr.mxu0 0.0
      %666 = vmatpush1.xpose.msra.mxu0 0.0
      %667 = vmatprep.subr.mxu0 0.0
      %668 = vmatpush1.xpose.msra.mxu0 0.0
      %669 = vmatprep.subr.mxu0 0.0
      %670 = vmatpush1.xpose.msra.mxu0 0.0
      %671 = vmatprep.subr.mxu0 0.0
      %672 = vmatpush1.xpose.msra.mxu0 0.0
      %673 = vmatprep.subr.mxu0 0.0
      %674 = vmatpush1.xpose.msra.mxu0 0.0
      %675 = vmatprep.subr.mxu0 0.0
      %676 = vmatpush1.xpose.msra.mxu0 0.0
      %677 = vmatprep.subr.mxu0 0.0
      %678 = vmatpush1.xpose.msra.mxu0 0.0
      %679 = vmatprep.subr.mxu0 0.0
      %680 = vmatpush1.xpose.msra.mxu0 0.0
      %681 = vmatprep.subr.mxu0 0.0
      %682 = vmatpush1.xpose.msra.mxu0 0.0
      %683 = vmatprep.subr.mxu0 0.0
      %684 = vmatpush1.xpose.msra.mxu0 0.0
      %685 = vmatprep.subr.mxu0 0.0
      %686 = vmatpush1.xpose.msra.mxu0 0.0
      %687 = vmatprep.subr.mxu0 0.0
      %688 = vmatpush1.xpose.msra.mxu0 0.0
      %689 = vmatprep.subr.mxu0 0.0
      %690 = vmatpush1.xpose.msra.mxu0 0.0
      %691 = vmatprep.subr.mxu0 0.0
      %692 = vmatpush1.xpose.msra.mxu0 0.0
      %693 = vmatprep.subr.mxu0 0.0
      %694 = vmatpush1.xpose.msra.mxu0 0.0
      %695 = vmatprep.subr.mxu0 0.0
      %696 = vmatpush1.xpose.msra.mxu0 0.0
      %697 = vmatprep.subr.mxu0 0.0
      %698 = vmatpush1.xpose.msra.mxu0 0.0
      %699 = vmatprep.subr.mxu0 0.0
      %700 = vmatpush1.xpose.msra.mxu0 0.0
      %701 = vmatprep.subr.mxu0 0.0
      %702 = vmatpush1.xpose.msra.mxu0 0.0
      %703 = vmatprep.subr.mxu0 0.0
      %704 = vmatpush1.xpose.msra.mxu0 0.0
      %705 = vmatprep.subr.mxu0 0.0
      %706 = vmatpush1.xpose.msra.mxu0 0.0
      %707 = vmatprep.subr.mxu0 0.0
      %708 = vmatpush1.xpose.msra.mxu0 0.0
      %709 = vmatprep.subr.mxu0 0.0
      %710 = vmatpush1.xpose.msra.mxu0 0.0
      %711 = vmatprep.subr.mxu0 0.0
      %712 = vmatpush1.xpose.msra.mxu0 0.0
      %713 = vmatprep.mubr.f32.mxu0 0.0
      %714 = vmatmul.mubr.f32.gmra.mrb[0].mxu0 %v641
      %v715 = vpop.f32.mrb[0].mxu0
      %v716 = vadd.f32 0.0, %v715
      %v717 = vpop.f32.mrb[0].mxu0
      %718 = vdwg.mxu0
      %v720 = vsel %vm560, %v554, 0
      %v723 = vsel %vm560, %v540, 0
      %v726 = vsel %vm560, %v541, 0
      %728 = vmatprep.subr.mxu0 0.0
      %729 = vmatpush1.xpose.msra.mxu0 %v723
      %730 = vmatprep.subr.mxu0 0.0
      %731 = vmatpush1.xpose.msra.mxu0 %v726
      %732 = vmatprep.subr.mxu0 0.0
      %733 = vmatpush1.xpose.msra.mxu0 0.0
      %734 = vmatprep.subr.mxu0 0.0
      %735 = vmatpush1.xpose.msra.mxu0 0.0
      %736 = vmatprep.subr.mxu0 0.0
      %737 = vmatpush1.xpose.msra.mxu0 0.0
      %738 = vmatprep.subr.mxu0 0.0
      %739 = vmatpush1.xpose.msra.mxu0 0.0
      %740 = vmatprep.subr.mxu0 0.0
      %741 = vmatpush1.xpose.msra.mxu0 0.0
      %742 = vmatprep.subr.mxu0 0.0
      %743 = vmatpush1.xpose.msra.mxu0 0.0
      %744 = vmatprep.subr.mxu0 0.0
      %745 = vmatpush1.xpose.msra.mxu0 0.0
      %746 = vmatprep.subr.mxu0 0.0
      %747 = vmatpush1.xpose.msra.mxu0 0.0
      %748 = vmatprep.subr.mxu0 0.0
      %749 = vmatpush1.xpose.msra.mxu0 0.0
      %750 = vmatprep.subr.mxu0 0.0
      %751 = vmatpush1.xpose.msra.mxu0 0.0
      %752 = vmatprep.subr.mxu0 0.0
      %753 = vmatpush1.xpose.msra.mxu0 0.0
      %754 = vmatprep.subr.mxu0 0.0
      %755 = vmatpush1.xpose.msra.mxu0 0.0
      %756 = vmatprep.subr.mxu0 0.0
      %757 = vmatpush1.xpose.msra.mxu0 0.0
      %758 = vmatprep.subr.mxu0 0.0
      %759 = vmatpush1.xpose.msra.mxu0 0.0
      %760 = vmatprep.subr.mxu0 0.0
      %761 = vmatpush1.xpose.msra.mxu0 0.0
      %762 = vmatprep.subr.mxu0 0.0
      %763 = vmatpush1.xpose.msra.mxu0 0.0
      %764 = vmatprep.subr.mxu0 0.0
      %765 = vmatpush1.xpose.msra.mxu0 0.0
      %766 = vmatprep.subr.mxu0 0.0
      %767 = vmatpush1.xpose.msra.mxu0 0.0
      %768 = vmatprep.subr.mxu0 0.0
      %769 = vmatpush1.xpose.msra.mxu0 0.0
      %770 = vmatprep.subr.mxu0 0.0
      %771 = vmatpush1.xpose.msra.mxu0 0.0
      %772 = vmatprep.subr.mxu0 0.0
      %773 = vmatpush1.xpose.msra.mxu0 0.0
      %774 = vmatprep.subr.mxu0 0.0
      %775 = vmatpush1.xpose.msra.mxu0 0.0
      %776 = vmatprep.subr.mxu0 0.0
      %777 = vmatpush1.xpose.msra.mxu0 0.0
      %778 = vmatprep.subr.mxu0 0.0
      %779 = vmatpush1.xpose.msra.mxu0 0.0
      %780 = vmatprep.subr.mxu0 0.0
      %781 = vmatpush1.xpose.msra.mxu0 0.0
      %782 = vmatprep.subr.mxu0 0.0
      %783 = vmatpush1.xpose.msra.mxu0 0.0
      %784 = vmatprep.subr.mxu0 0.0
      %785 = vmatpush1.xpose.msra.mxu0 0.0
      %786 = vmatprep.subr.mxu0 0.0
      %787 = vmatpush1.xpose.msra.mxu0 0.0
      %788 = vmatprep.subr.mxu0 0.0
      %789 = vmatpush1.xpose.msra.mxu0 0.0
      %790 = vmatprep.subr.mxu0 0.0
      %791 = vmatpush1.xpose.msra.mxu0 0.0
      %792 = vmatprep.mubr.f32.mxu0 0.0
      %793 = vmatmul.mubr.f32.gmra.mrb[0].mxu0 %v720
      %v794 = vpop.f32.mrb[0].mxu0
      %v795 = vadd.f32 0.0, %v794
      %v796 = vpop.f32.mrb[0].mxu0
      %797 = vdwg.mxu0
      %v799 = vsel %vm560, %v555, 0
      %v802 = vsel %vm560, %v542, 0
      %v805 = vsel %vm560, %v543, 0
      %807 = vmatprep.subr.mxu0 0.0
      %808 = vmatpush1.xpose.msra.mxu0 %v802
      %809 = vmatprep.subr.mxu0 0.0
      %810 = vmatpush1.xpose.msra.mxu0 %v805
      %811 = vmatprep.subr.mxu0 0.0
      %812 = vmatpush1.xpose.msra.mxu0 0.0
      %813 = vmatprep.subr.mxu0 0.0
      %814 = vmatpush1.xpose.msra.mxu0 0.0
      %815 = vmatprep.subr.mxu0 0.0
      %816 = vmatpush1.xpose.msra.mxu0 0.0
      %817 = vmatprep.subr.mxu0 0.0
      %818 = vmatpush1.xpose.msra.mxu0 0.0
      %819 = vmatprep.subr.mxu0 0.0
      %820 = vmatpush1.xpose.msra.mxu0 0.0
      %821 = vmatprep.subr.mxu0 0.0
      %822 = vmatpush1.xpose.msra.mxu0 0.0
      %823 = vmatprep.subr.mxu0 0.0
      %824 = vmatpush1.xpose.msra.mxu0 0.0
      %825 = vmatprep.subr.mxu0 0.0
      %826 = vmatpush1.xpose.msra.mxu0 0.0
      %827 = vmatprep.subr.mxu0 0.0
      %828 = vmatpush1.xpose.msra.mxu0 0.0
      %829 = vmatprep.subr.mxu0 0.0
      %830 = vmatpush1.xpose.msra.mxu0 0.0
      %831 = vmatprep.subr.mxu0 0.0
      %832 = vmatpush1.xpose.msra.mxu0 0.0
      %833 = vmatprep.subr.mxu0 0.0
      %834 = vmatpush1.xpose.msra.mxu0 0.0
      %835 = vmatprep.subr.mxu0 0.0
      %836 = vmatpush1.xpose.msra.mxu0 0.0
      %837 = vmatprep.subr.mxu0 0.0
      %838 = vmatpush1.xpose.msra.mxu0 0.0
      %839 = vmatprep.subr.mxu0 0.0
      %840 = vmatpush1.xpose.msra.mxu0 0.0
      %841 = vmatprep.subr.mxu0 0.0
      %842 = vmatpush1.xpose.msra.mxu0 0.0
      %843 = vmatprep.subr.mxu0 0.0
      %844 = vmatpush1.xpose.msra.mxu0 0.0
      %845 = vmatprep.subr.mxu0 0.0
      %846 = vmatpush1.xpose.msra.mxu0 0.0
      %847 = vmatprep.subr.mxu0 0.0
      %848 = vmatpush1.xpose.msra.mxu0 0.0
      %849 = vmatprep.subr.mxu0 0.0
      %850 = vmatpush1.xpose.msra.mxu0 0.0
      %851 = vmatprep.subr.mxu0 0.0
      %852 = vmatpush1.xpose.msra.mxu0 0.0
      %853 = vmatprep.subr.mxu0 0.0
      %854 = vmatpush1.xpose.msra.mxu0 0.0
      %855 = vmatprep.subr.mxu0 0.0
      %856 = vmatpush1.xpose.msra.mxu0 0.0
      %857 = vmatprep.subr.mxu0 0.0
      %858 = vmatpush1.xpose.msra.mxu0 0.0
      %859 = vmatprep.subr.mxu0 0.0
      %860 = vmatpush1.xpose.msra.mxu0 0.0
      %861 = vmatprep.subr.mxu0 0.0
      %862 = vmatpush1.xpose.msra.mxu0 0.0
      %863 = vmatprep.subr.mxu0 0.0
      %864 = vmatpush1.xpose.msra.mxu0 0.0
      %865 = vmatprep.subr.mxu0 0.0
      %866 = vmatpush1.xpose.msra.mxu0 0.0
      %867 = vmatprep.subr.mxu0 0.0
      %868 = vmatpush1.xpose.msra.mxu0 0.0
      %869 = vmatprep.subr.mxu0 0.0
      %870 = vmatpush1.xpose.msra.mxu0 0.0
      %871 = vmatprep.mubr.f32.mxu0 0.0
      %872 = vmatmul.mubr.f32.gmra.mrb[0].mxu0 %v799
      %v873 = vpop.f32.mrb[0].mxu0
      %v874 = vadd.f32 0.0, %v873
      %v875 = vpop.f32.mrb[0].mxu0
      %876 = vdwg.mxu0
      %v878 = vsel %vm560, %v556, 0
      %v881 = vsel %vm560, %v544, 0
      %v884 = vsel %vm560, %v545, 0
      %886 = vmatprep.subr.mxu0 0.0
      %887 = vmatpush1.xpose.msra.mxu0 %v881
      %888 = vmatprep.subr.mxu0 0.0
      %889 = vmatpush1.xpose.msra.mxu0 %v884
      %890 = vmatprep.subr.mxu0 0.0
      %891 = vmatpush1.xpose.msra.mxu0 0.0
      %892 = vmatprep.subr.mxu0 0.0
      %893 = vmatpush1.xpose.msra.mxu0 0.0
      %894 = vmatprep.subr.mxu0 0.0
      %895 = vmatpush1.xpose.msra.mxu0 0.0
      %896 = vmatprep.subr.mxu0 0.0
      %897 = vmatpush1.xpose.msra.mxu0 0.0
      %898 = vmatprep.subr.mxu0 0.0
      %899 = vmatpush1.xpose.msra.mxu0 0.0
      %900 = vmatprep.subr.mxu0 0.0
      %901 = vmatpush1.xpose.msra.mxu0 0.0
      %902 = vmatprep.subr.mxu0 0.0
      %903 = vmatpush1.xpose.msra.mxu0 0.0
      %904 = vmatprep.subr.mxu0 0.0
      %905 = vmatpush1.xpose.msra.mxu0 0.0
      %906 = vmatprep.subr.mxu0 0.0
      %907 = vmatpush1.xpose.msra.mxu0 0.0
      %908 = vmatprep.subr.mxu0 0.0
      %909 = vmatpush1.xpose.msra.mxu0 0.0
      %910 = vmatprep.subr.mxu0 0.0
      %911 = vmatpush1.xpose.msra.mxu0 0.0
      %912 = vmatprep.subr.mxu0 0.0
      %913 = vmatpush1.xpose.msra.mxu0 0.0
      %914 = vmatprep.subr.mxu0 0.0
      %915 = vmatpush1.xpose.msra.mxu0 0.0
      %916 = vmatprep.subr.mxu0 0.0
      %917 = vmatpush1.xpose.msra.mxu0 0.0
      %918 = vmatprep.subr.mxu0 0.0
      %919 = vmatpush1.xpose.msra.mxu0 0.0
      %920 = vmatprep.subr.mxu0 0.0
      %921 = vmatpush1.xpose.msra.mxu0 0.0
      %922 = vmatprep.subr.mxu0 0.0
      %923 = vmatpush1.xpose.msra.mxu0 0.0
      %924 = vmatprep.subr.mxu0 0.0
      %925 = vmatpush1.xpose.msra.mxu0 0.0
      %926 = vmatprep.subr.mxu0 0.0
      %927 = vmatpush1.xpose.msra.mxu0 0.0
      %928 = vmatprep.subr.mxu0 0.0
      %929 = vmatpush1.xpose.msra.mxu0 0.0
      %930 = vmatprep.subr.mxu0 0.0
      %931 = vmatpush1.xpose.msra.mxu0 0.0
      %932 = vmatprep.subr.mxu0 0.0
      %933 = vmatpush1.xpose.msra.mxu0 0.0
      %934 = vmatprep.subr.mxu0 0.0
      %935 = vmatpush1.xpose.msra.mxu0 0.0
      %936 = vmatprep.subr.mxu0 0.0
      %937 = vmatpush1.xpose.msra.mxu0 0.0
      %938 = vmatprep.subr.mxu0 0.0
      %939 = vmatpush1.xpose.msra.mxu0 0.0
      %940 = vmatprep.subr.mxu0 0.0
      %941 = vmatpush1.xpose.msra.mxu0 0.0
      %942 = vmatprep.subr.mxu0 0.0
      %943 = vmatpush1.xpose.msra.mxu0 0.0
      %944 = vmatprep.subr.mxu0 0.0
      %945 = vmatpush1.xpose.msra.mxu0 0.0
      %946 = vmatprep.subr.mxu0 0.0
      %947 = vmatpush1.xpose.msra.mxu0 0.0
      %948 = vmatprep.subr.mxu0 0.0
      %949 = vmatpush1.xpose.msra.mxu0 0.0
      %950 = vmatprep.mubr.f32.mxu0 0.0
      %951 = vmatmul.mubr.f32.gmra.mrb[0].mxu0 %v878
      %v952 = vpop.f32.mrb[0].mxu0
      %v953 = vadd.f32 0.0, %v952
      %v954 = vpop.f32.mrb[0].mxu0
      %955 = vdwg.mxu0
      %v957 = vsel %vm560, %v557, 0
      %v960 = vsel %vm560, %v546, 0
      %v963 = vsel %vm560, %v547, 0
      %965 = vmatprep.subr.mxu0 0.0
      %966 = vmatpush1.xpose.msra.mxu0 %v960
      %967 = vmatprep.subr.mxu0 0.0
      %968 = vmatpush1.xpose.msra.mxu0 %v963
      %969 = vmatprep.subr.mxu0 0.0
      %970 = vmatpush1.xpose.msra.mxu0 0.0
      %971 = vmatprep.subr.mxu0 0.0
      %972 = vmatpush1.xpose.msra.mxu0 0.0
      %973 = vmatprep.subr.mxu0 0.0
      %974 = vmatpush1.xpose.msra.mxu0 0.0
      %975 = vmatprep.subr.mxu0 0.0
      %976 = vmatpush1.xpose.msra.mxu0 0.0
      %977 = vmatprep.subr.mxu0 0.0
      %978 = vmatpush1.xpose.msra.mxu0 0.0
      %979 = vmatprep.subr.mxu0 0.0
      %980 = vmatpush1.xpose.msra.mxu0 0.0
      %981 = vmatprep.subr.mxu0 0.0
      %982 = vmatpush1.xpose.msra.mxu0 0.0
      %983 = vmatprep.subr.mxu0 0.0
      %984 = vmatpush1.xpose.msra.mxu0 0.0
      %985 = vmatprep.subr.mxu0 0.0
      %986 = vmatpush1.xpose.msra.mxu0 0.0
      %987 = vmatprep.subr.mxu0 0.0
      %988 = vmatpush1.xpose.msra.mxu0 0.0
      %989 = vmatprep.subr.mxu0 0.0
      %990 = vmatpush1.xpose.msra.mxu0 0.0
      %991 = vmatprep.subr.mxu0 0.0
      %992 = vmatpush1.xpose.msra.mxu0 0.0
      %993 = vmatprep.subr.mxu0 0.0
      %994 = vmatpush1.xpose.msra.mxu0 0.0
      %995 = vmatprep.subr.mxu0 0.0
      %996 = vmatpush1.xpose.msra.mxu0 0.0
      %997 = vmatprep.subr.mxu0 0.0
      %998 = vmatpush1.xpose.msra.mxu0 0.0
      %999 = vmatprep.subr.mxu0 0.0
      %1000 = vmatpush1.xpose.msra.mxu0 0.0
      %1001 = vmatprep.subr.mxu0 0.0
      %1002 = vmatpush1.xpose.msra.mxu0 0.0
      %1003 = vmatprep.subr.mxu0 0.0
      %1004 = vmatpush1.xpose.msra.mxu0 0.0
      %1005 = vmatprep.subr.mxu0 0.0
      %1006 = vmatpush1.xpose.msra.mxu0 0.0
      %1007 = vmatprep.subr.mxu0 0.0
      %1008 = vmatpush1.xpose.msra.mxu0 0.0
      %1009 = vmatprep.subr.mxu0 0.0
      %1010 = vmatpush1.xpose.msra.mxu0 0.0
      %1011 = vmatprep.subr.mxu0 0.0
      %1012 = vmatpush1.xpose.msra.mxu0 0.0
      %1013 = vmatprep.subr.mxu0 0.0
      %1014 = vmatpush1.xpose.msra.mxu0 0.0
      %1015 = vmatprep.subr.mxu0 0.0
      %1016 = vmatpush1.xpose.msra.mxu0 0.0
      %1017 = vmatprep.subr.mxu0 0.0
      %1018 = vmatpush1.xpose.msra.mxu0 0.0
      %1019 = vmatprep.subr.mxu0 0.0
      %1020 = vmatpush1.xpose.msra.mxu0 0.0
      %1021 = vmatprep.subr.mxu0 0.0
      %1022 = vmatpush1.xpose.msra.mxu0 0.0
      %1023 = vmatprep.subr.mxu0 0.0
      %1024 = vmatpush1.xpose.msra.mxu0 0.0
      %1025 = vmatprep.subr.mxu0 0.0
      %1026 = vmatpush1.xpose.msra.mxu0 0.0
      %1027 = vmatprep.subr.mxu0 0.0
      %1028 = vmatpush1.xpose.msra.mxu0 0.0
      %1029 = vmatprep.mubr.f32.mxu0 0.0
      %1030 = vmatmul.mubr.f32.gmra.mrb[0].mxu0 %v957
      %v1031 = vpop.f32.mrb[0].mxu0
      %v1032 = vadd.f32 0.0, %v1031
      %v1033 = vpop.f32.mrb[0].mxu0
      %1034 = vdwg.mxu0
      %v1036 = vsel %vm560, %v558, 0
      %v1039 = vsel %vm560, %v548, 0
      %v1042 = vsel %vm560, %v549, 0
      %1044 = vmatprep.subr.mxu0 0.0
      %1045 = vmatpush1.xpose.msra.mxu0 %v1039
      %1046 = vmatprep.subr.mxu0 0.0
      %1047 = vmatpush1.xpose.msra.mxu0 %v1042
      %1048 = vmatprep.subr.mxu0 0.0
      %1049 = vmatpush1.xpose.msra.mxu0 0.0
      %1050 = vmatprep.subr.mxu0 0.0
      %1051 = vmatpush1.xpose.msra.mxu0 0.0
      %1052 = vmatprep.subr.mxu0 0.0
      %1053 = vmatpush1.xpose.msra.mxu0 0.0
      %1054 = vmatprep.subr.mxu0 0.0
      %1055 = vmatpush1.xpose.msra.mxu0 0.0
      %1056 = vmatprep.subr.mxu0 0.0
      %1057 = vmatpush1.xpose.msra.mxu0 0.0
      %1058 = vmatprep.subr.mxu0 0.0
      %1059 = vmatpush1.xpose.msra.mxu0 0.0
      %1060 = vmatprep.subr.mxu0 0.0
      %1061 = vmatpush1.xpose.msra.mxu0 0.0
      %1062 = vmatprep.subr.mxu0 0.0
      %1063 = vmatpush1.xpose.msra.mxu0 0.0
      %1064 = vmatprep.subr.mxu0 0.0
      %1065 = vmatpush1.xpose.msra.mxu0 0.0
      %1066 = vmatprep.subr.mxu0 0.0
      %1067 = vmatpush1.xpose.msra.mxu0 0.0
      %1068 = vmatprep.subr.mxu0 0.0
      %1069 = vmatpush1.xpose.msra.mxu0 0.0
      %1070 = vmatprep.subr.mxu0 0.0
      %1071 = vmatpush1.xpose.msra.mxu0 0.0
      %1072 = vmatprep.subr.mxu0 0.0
      %1073 = vmatpush1.xpose.msra.mxu0 0.0
      %1074 = vmatprep.subr.mxu0 0.0
      %1075 = vmatpush1.xpose.msra.mxu0 0.0
      %1076 = vmatprep.subr.mxu0 0.0
      %1077 = vmatpush1.xpose.msra.mxu0 0.0
      %1078 = vmatprep.subr.mxu0 0.0
      %1079 = vmatpush1.xpose.msra.mxu0 0.0
      %1080 = vmatprep.subr.mxu0 0.0
      %1081 = vmatpush1.xpose.msra.mxu0 0.0
      %1082 = vmatprep.subr.mxu0 0.0
      %1083 = vmatpush1.xpose.msra.mxu0 0.0
      %1084 = vmatprep.subr.mxu0 0.0
      %1085 = vmatpush1.xpose.msra.mxu0 0.0
      %1086 = vmatprep.subr.mxu0 0.0
      %1087 = vmatpush1.xpose.msra.mxu0 0.0
      %1088 = vmatprep.subr.mxu0 0.0
      %1089 = vmatpush1.xpose.msra.mxu0 0.0
      %1090 = vmatprep.subr.mxu0 0.0
      %1091 = vmatpush1.xpose.msra.mxu0 0.0
      %1092 = vmatprep.subr.mxu0 0.0
      %1093 = vmatpush1.xpose.msra.mxu0 0.0
      %1094 = vmatprep.subr.mxu0 0.0
      %1095 = vmatpush1.xpose.msra.mxu0 0.0
      %1096 = vmatprep.subr.mxu0 0.0
      %1097 = vmatpush1.xpose.msra.mxu0 0.0
      %1098 = vmatprep.subr.mxu0 0.0
      %1099 = vmatpush1.xpose.msra.mxu0 0.0
      %1100 = vmatprep.subr.mxu0 0.0
      %1101 = vmatpush1.xpose.msra.mxu0 0.0
      %1102 = vmatprep.subr.mxu0 0.0
      %1103 = vmatpush1.xpose.msra.mxu0 0.0
      %1104 = vmatprep.subr.mxu0 0.0
      %1105 = vmatpush1.xpose.msra.mxu0 0.0
      %1106 = vmatprep.subr.mxu0 0.0
      %1107 = vmatpush1.xpose.msra.mxu0 0.0
      %1108 = vmatprep.mubr.f32.mxu0 0.0
      %1109 = vmatmul.mubr.f32.gmra.mrb[0].mxu0 %v1036
      %v1110 = vpop.f32.mrb[0].mxu0
      %v1111 = vadd.f32 0.0, %v1110
      %v1112 = vpop.f32.mrb[0].mxu0
      %1113 = vdwg.mxu0
      %v1115 = vsel %vm560, %v559, 0
      %v1118 = vsel %vm560, %v550, 0
      %v1121 = vsel %vm560, %v551, 0
      %1123 = vmatprep.subr.mxu0 0.0
      %1124 = vmatpush1.xpose.msra.mxu0 %v1118
      %1125 = vmatprep.subr.mxu0 0.0
      %1126 = vmatpush1.xpose.msra.mxu0 %v1121
      %1127 = vmatprep.subr.mxu0 0.0
      %1128 = vmatpush1.xpose.msra.mxu0 0.0
      %1129 = vmatprep.subr.mxu0 0.0
      %1130 = vmatpush1.xpose.msra.mxu0 0.0
      %1131 = vmatprep.subr.mxu0 0.0
      %1132 = vmatpush1.xpose.msra.mxu0 0.0
      %1133 = vmatprep.subr.mxu0 0.0
      %1134 = vmatpush1.xpose.msra.mxu0 0.0
      %1135 = vmatprep.subr.mxu0 0.0
      %1136 = vmatpush1.xpose.msra.mxu0 0.0
      %1137 = vmatprep.subr.mxu0 0.0
      %1138 = vmatpush1.xpose.msra.mxu0 0.0
      %1139 = vmatprep.subr.mxu0 0.0
      %1140 = vmatpush1.xpose.msra.mxu0 0.0
      %1141 = vmatprep.subr.mxu0 0.0
      %1142 = vmatpush1.xpose.msra.mxu0 0.0
      %1143 = vmatprep.subr.mxu0 0.0
      %1144 = vmatpush1.xpose.msra.mxu0 0.0
      %1145 = vmatprep.subr.mxu0 0.0
      %1146 = vmatpush1.xpose.msra.mxu0 0.0
      %1147 = vmatprep.subr.mxu0 0.0
      %1148 = vmatpush1.xpose.msra.mxu0 0.0
      %1149 = vmatprep.subr.mxu0 0.0
      %1150 = vmatpush1.xpose.msra.mxu0 0.0
      %1151 = vmatprep.subr.mxu0 0.0
      %1152 = vmatpush1.xpose.msra.mxu0 0.0
      %1153 = vmatprep.subr.mxu0 0.0
      %1154 = vmatpush1.xpose.msra.mxu0 0.0
      %1155 = vmatprep.subr.mxu0 0.0
      %1156 = vmatpush1.xpose.msra.mxu0 0.0
      %1157 = vmatprep.subr.mxu0 0.0
      %1158 = vmatpush1.xpose.msra.mxu0 0.0
      %1159 = vmatprep.subr.mxu0 0.0
      %1160 = vmatpush1.xpose.msra.mxu0 0.0
      %1161 = vmatprep.subr.mxu0 0.0
      %1162 = vmatpush1.xpose.msra.mxu0 0.0
      %1163 = vmatprep.subr.mxu0 0.0
      %1164 = vmatpush1.xpose.msra.mxu0 0.0
      %1165 = vmatprep.subr.mxu0 0.0
      %1166 = vmatpush1.xpose.msra.mxu0 0.0
      %1167 = vmatprep.subr.mxu0 0.0
      %1168 = vmatpush1.xpose.msra.mxu0 0.0
      %1169 = vmatprep.subr.mxu0 0.0
      %1170 = vmatpush1.xpose.msra.mxu0 0.0
      %1171 = vmatprep.subr.mxu0 0.0
      %1172 = vmatpush1.xpose.msra.mxu0 0.0
      %1173 = vmatprep.subr.mxu0 0.0
      %1174 = vmatpush1.xpose.msra.mxu0 0.0
      %1175 = vmatprep.subr.mxu0 0.0
      %1176 = vmatpush1.xpose.msra.mxu0 0.0
      %1177 = vmatprep.subr.mxu0 0.0
      %1178 = vmatpush1.xpose.msra.mxu0 0.0
      %1179 = vmatprep.subr.mxu0 0.0
      %1180 = vmatpush1.xpose.msra.mxu0 0.0
      %1181 = vmatprep.subr.mxu0 0.0
      %1182 = vmatpush1.xpose.msra.mxu0 0.0
      %1183 = vmatprep.subr.mxu0 0.0
      %1184 = vmatpush1.xpose.msra.mxu0 0.0
      %1185 = vmatprep.subr.mxu0 0.0
      %1186 = vmatpush1.xpose.msra.mxu0 0.0
      %1187 = vmatprep.mubr.f32.mxu0 0.0
      %1188 = vmatmul.mubr.f32.gmra.mrb[0].mxu0 %v1115
      %v1189 = vpop.f32.mrb[0].mxu0
      %v1190 = vadd.f32 0.0, %v1189
      %v1191 = vpop.f32.mrb[0].mxu0
      %1192 = vdwg.mxu0
      %vm1193 = vcmask 122880
      %v1194 = vsel %vm1193, %v637, -inf
      %1195 = vmax.xlane.f32.xlu0 %v1194
      %v1196 = vpop.xlane.xlu0 %1195
      %v1197 = vsel %vm1193, %v716, -inf
      %1198 = vmax.xlane.f32.xlu0 %v1197
      %v1199 = vpop.xlane.xlu0 %1198
      %v1200 = vsel %vm1193, %v795, -inf
      %1201 = vmax.xlane.f32.xlu0 %v1200
      %v1202 = vpop.xlane.xlu0 %1201
      %v1203 = vsel %vm1193, %v874, -inf
      %1204 = vmax.xlane.f32.xlu0 %v1203
      %v1205 = vpop.xlane.xlu0 %1204
      %v1206 = vsel %vm1193, %v953, -inf
      %1207 = vmax.xlane.f32.xlu0 %v1206
      %v1208 = vpop.xlane.xlu0 %1207
      %v1209 = vsel %vm1193, %v1032, -inf
      %1210 = vmax.xlane.f32.xlu0 %v1209
      %v1211 = vpop.xlane.xlu0 %1210
      %v1212 = vsel %vm1193, %v1111, -inf
      %1213 = vmax.xlane.f32.xlu0 %v1212
      %v1214 = vpop.xlane.xlu0 %1213
      %v1215 = vsel %vm1193, %v1190, -inf
      %1216 = vmax.xlane.f32.xlu0 %v1215
      %v1217 = vpop.xlane.xlu0 %1216
      %v1218 = vsub.f32 %v637, %v1196
      %v1219 = vsub.f32 %v716, %v1199
      %v1220 = vsub.f32 %v795, %v1202
      %v1221 = vsub.f32 %v874, %v1205
      %v1222 = vsub.f32 %v953, %v1208
      %v1223 = vsub.f32 %v1032, %v1211
      %v1224 = vsub.f32 %v1111, %v1214
      %v1225 = vsub.f32 %v1190, %v1217
      %v1226 = vmul.f32 %v1218, 1.442695
      %v1227 = vpow.pop %v1226
      %v1228 = vmul.f32 %v1219, 1.442695
      %v1229 = vpow.pop %v1228
      %v1230 = vmul.f32 %v1220, 1.442695
      %v1231 = vpow.pop %v1230
      %v1232 = vmul.f32 %v1221, 1.442695
      %v1233 = vpow.pop %v1232
      %v1234 = vmul.f32 %v1222, 1.442695
      %v1235 = vpow.pop %v1234
      %v1236 = vmul.f32 %v1223, 1.442695
      %v1237 = vpow.pop %v1236
      %v1238 = vmul.f32 %v1224, 1.442695
      %v1239 = vpow.pop %v1238
      %v1240 = vmul.f32 %v1225, 1.442695
      %v1241 = vpow.pop %v1240
      %v1242 = vsel %vm1193, %v1227, 0.0
      %1243 = vadd.xlane.f32.xlu0 %v1242
      %v1244 = vpop.xlane.xlu0 %1243
      %v1245 = vsel %vm1193, %v1229, 0.0
      %1246 = vadd.xlane.f32.xlu0 %v1245
      %v1247 = vpop.xlane.xlu0 %1246
      %v1248 = vsel %vm1193, %v1231, 0.0
      %1249 = vadd.xlane.f32.xlu0 %v1248
      %v1250 = vpop.xlane.xlu0 %1249
      %v1251 = vsel %vm1193, %v1233, 0.0
      %1252 = vadd.xlane.f32.xlu0 %v1251
      %v1253 = vpop.xlane.xlu0 %1252
      %v1254 = vsel %vm1193, %v1235, 0.0
      %1255 = vadd.xlane.f32.xlu0 %v1254
      %v1256 = vpop.xlane.xlu0 %1255
      %v1257 = vsel %vm1193, %v1237, 0.0
      %1258 = vadd.xlane.f32.xlu0 %v1257
      %v1259 = vpop.xlane.xlu0 %1258
      %v1260 = vsel %vm1193, %v1239, 0.0
      %1261 = vadd.xlane.f32.xlu0 %v1260
      %v1262 = vpop.xlane.xlu0 %1261
      %v1263 = vsel %vm1193, %v1241, 0.0
      %1264 = vadd.xlane.f32.xlu0 %v1263
      %v1265 = vpop.xlane.xlu0 %1264
      %v1266 = vrcp.pop %v1244
      %v1267 = vrcp.pop %v1247
      %v1268 = vrcp.pop %v1250
      %v1269 = vrcp.pop %v1253
      %v1270 = vrcp.pop %v1256
      %v1271 = vrcp.pop %v1259
      %v1272 = vrcp.pop %v1262
      %v1273 = vrcp.pop %v1265
      %v1274 = vmul.f32 %v1227, %v1266
      %v1275 = vmul.f32 %v1229, %v1267
      %v1276 = vmul.f32 %v1231, %v1268
      %v1277 = vmul.f32 %v1233, %v1269
      %v1278 = vmul.f32 %v1235, %v1270
      %v1279 = vmul.f32 %v1237, %v1271
      %v1280 = vmul.f32 %v1239, %v1272
      %v1281 = vmul.f32 %v1241, %v1273
      %vm1282 = vcmask 130048
      %v1284 = vsel %vm1282, %v1274, 0
      %1286 = vmatprep.subr.mxu0 0.0
      %1287 = vmatpush1.msra.mxu0 %v536
      %1288 = vmatprep.subr.mxu0 0.0
      %1289 = vmatpush1.msra.mxu0 %v537
      %1290 = vmatprep.subr.mxu0 0.0
      %1291 = vmatpush1.msra.mxu0 0.0
      %1292 = vmatprep.subr.mxu0 0.0
      %1293 = vmatpush1.msra.mxu0 0.0
      %1294 = vmatprep.subr.mxu0 0.0
      %1295 = vmatpush1.msra.mxu0 0.0
      %1296 = vmatprep.subr.mxu0 0.0
      %1297 = vmatpush1.msra.mxu0 0.0
      %1298 = vmatprep.subr.mxu0 0.0
      %1299 = vmatpush1.msra.mxu0 0.0
      %1300 = vmatprep.subr.mxu0 0.0
      %1301 = vmatpush1.msra.mxu0 0.0
      %1302 = vmatprep.subr.mxu0 0.0
      %1303 = vmatpush1.msra.mxu0 0.0
      %1304 = vmatprep.subr.mxu0 0.0
      %1305 = vmatpush1.msra.mxu0 0.0
      %1306 = vmatprep.subr.mxu0 0.0
      %1307 = vmatpush1.msra.mxu0 0.0
      %1308 = vmatprep.subr.mxu0 0.0
      %1309 = vmatpush1.msra.mxu0 0.0
      %1310 = vmatprep.subr.mxu0 0.0
      %1311 = vmatpush1.msra.mxu0 0.0
      %1312 = vmatprep.subr.mxu0 0.0
      %1313 = vmatpush1.msra.mxu0 0.0
      %1314 = vmatprep.subr.mxu0 0.0
      %1315 = vmatpush1.msra.mxu0 0.0
      %1316 = vmatprep.subr.mxu0 0.0
      %1317 = vmatpush1.msra.mxu0 0.0
      %1318 = vmatprep.subr.mxu0 0.0
      %1319 = vmatpush1.msra.mxu0 0.0
      %1320 = vmatprep.subr.mxu0 0.0
      %1321 = vmatpush1.msra.mxu0 0.0
      %1322 = vmatprep.subr.mxu0 0.0
      %1323 = vmatpush1.msra.mxu0 0.0
      %1324 = vmatprep.subr.mxu0 0.0
      %1325 = vmatpush1.msra.mxu0 0.0
      %1326 = vmatprep.subr.mxu0 0.0
      %1327 = vmatpush1.msra.mxu0 0.0
      %1328 = vmatprep.subr.mxu0 0.0
      %1329 = vmatpush1.msra.mxu0 0.0
      %1330 = vmatprep.subr.mxu0 0.0
      %1331 = vmatpush1.msra.mxu0 0.0
      %1332 = vmatprep.subr.mxu0 0.0
      %1333 = vmatpush1.msra.mxu0 0.0
      %1334 = vmatprep.subr.mxu0 0.0
      %1335 = vmatpush1.msra.mxu0 0.0
      %1336 = vmatprep.subr.mxu0 0.0
      %1337 = vmatpush1.msra.mxu0 0.0
      %1338 = vmatprep.subr.mxu0 0.0
      %1339 = vmatpush1.msra.mxu0 0.0
      %1340 = vmatprep.subr.mxu0 0.0
      %1341 = vmatpush1.msra.mxu0 0.0
      %1342 = vmatprep.subr.mxu0 0.0
      %1343 = vmatpush1.msra.mxu0 0.0
      %1344 = vmatprep.subr.mxu0 0.0
      %1345 = vmatpush1.msra.mxu0 0.0
      %1346 = vmatprep.subr.mxu0 0.0
      %1347 = vmatpush1.msra.mxu0 0.0
      %1348 = vmatprep.subr.mxu0 0.0
      %1349 = vmatpush1.msra.mxu0 0.0
      %1350 = vmatprep.mubr.f32.mxu0 0.0
      %1351 = vmatmul.mubr.f32.gmra.mrb[0].mxu0 %v1284
      %v1352 = vpop.f32.mrb[0].mxu0
      %v1353 = vadd.f32 0.0, %v1352
      %v1354 = vpop.f32.mrb[0].mxu0
      %1355 = vdwg.mxu0
      %v1357 = vsel %vm1282, %v1275, 0
      %1359 = vmatprep.subr.mxu0 0.0
      %1360 = vmatpush1.msra.mxu0 %v538
      %1361 = vmatprep.subr.mxu0 0.0
      %1362 = vmatpush1.msra.mxu0 %v539
      %1363 = vmatprep.subr.mxu0 0.0
      %1364 = vmatpush1.msra.mxu0 0.0
      %1365 = vmatprep.subr.mxu0 0.0
      %1366 = vmatpush1.msra.mxu0 0.0
      %1367 = vmatprep.subr.mxu0 0.0
      %1368 = vmatpush1.msra.mxu0 0.0
      %1369 = vmatprep.subr.mxu0 0.0
      %1370 = vmatpush1.msra.mxu0 0.0
      %1371 = vmatprep.subr.mxu0 0.0
      %1372 = vmatpush1.msra.mxu0 0.0
      %1373 = vmatprep.subr.mxu0 0.0
      %1374 = vmatpush1.msra.mxu0 0.0
      %1375 = vmatprep.subr.mxu0 0.0
      %1376 = vmatpush1.msra.mxu0 0.0
      %1377 = vmatprep.subr.mxu0 0.0
      %1378 = vmatpush1.msra.mxu0 0.0
      %1379 = vmatprep.subr.mxu0 0.0
      %1380 = vmatpush1.msra.mxu0 0.0
      %1381 = vmatprep.subr.mxu0 0.0
      %1382 = vmatpush1.msra.mxu0 0.0
      %1383 = vmatprep.subr.mxu0 0.0
      %1384 = vmatpush1.msra.mxu0 0.0
      %1385 = vmatprep.subr.mxu0 0.0
      %1386 = vmatpush1.msra.mxu0 0.0
      %1387 = vmatprep.subr.mxu0 0.0
      %1388 = vmatpush1.msra.mxu0 0.0
      %1389 = vmatprep.subr.mxu0 0.0
      %1390 = vmatpush1.msra.mxu0 0.0
      %1391 = vmatprep.subr.mxu0 0.0
      %1392 = vmatpush1.msra.mxu0 0.0
      %1393 = vmatprep.subr.mxu0 0.0
      %1394 = vmatpush1.msra.mxu0 0.0
      %1395 = vmatprep.subr.mxu0 0.0
      %1396 = vmatpush1.msra.mxu0 0.0
      %1397 = vmatprep.subr.mxu0 0.0
      %1398 = vmatpush1.msra.mxu0 0.0
      %1399 = vmatprep.subr.mxu0 0.0
      %1400 = vmatpush1.msra.mxu0 0.0
      %1401 = vmatprep.subr.mxu0 0.0
      %1402 = vmatpush1.msra.mxu0 0.0
      %1403 = vmatprep.subr.mxu0 0.0
      %1404 = vmatpush1.msra.mxu0 0.0
      %1405 = vmatprep.subr.mxu0 0.0
      %1406 = vmatpush1.msra.mxu0 0.0
      %1407 = vmatprep.subr.mxu0 0.0
      %1408 = vmatpush1.msra.mxu0 0.0
      %1409 = vmatprep.subr.mxu0 0.0
      %1410 = vmatpush1.msra.mxu0 0.0
      %1411 = vmatprep.subr.mxu0 0.0
      %1412 = vmatpush1.msra.mxu0 0.0
      %1413 = vmatprep.subr.mxu0 0.0
      %1414 = vmatpush1.msra.mxu0 0.0
      %1415 = vmatprep.subr.mxu0 0.0
      %1416 = vmatpush1.msra.mxu0 0.0
      %1417 = vmatprep.subr.mxu0 0.0
      %1418 = vmatpush1.msra.mxu0 0.0
      %1419 = vmatprep.subr.mxu0 0.0
      %1420 = vmatpush1.msra.mxu0 0.0
      %1421 = vmatprep.subr.mxu0 0.0
      %1422 = vmatpush1.msra.mxu0 0.0
      %1423 = vmatprep.mubr.f32.mxu0 0.0
      %1424 = vmatmul.mubr.f32.gmra.mrb[0].mxu0 %v1357
      %v1425 = vpop.f32.mrb[0].mxu0
      %v1426 = vadd.f32 0.0, %v1425
      %v1427 = vpop.f32.mrb[0].mxu0
      %1428 = vdwg.mxu0
      %v1430 = vsel %vm1282, %v1276, 0
      %1432 = vmatprep.subr.mxu0 0.0
      %1433 = vmatpush1.msra.mxu0 %v540
      %1434 = vmatprep.subr.mxu0 0.0
      %1435 = vmatpush1.msra.mxu0 %v541
      %1436 = vmatprep.subr.mxu0 0.0
      %1437 = vmatpush1.msra.mxu0 0.0
      %1438 = vmatprep.subr.mxu0 0.0
      %1439 = vmatpush1.msra.mxu0 0.0
      %1440 = vmatprep.subr.mxu0 0.0
      %1441 = vmatpush1.msra.mxu0 0.0
      %1442 = vmatprep.subr.mxu0 0.0
      %1443 = vmatpush1.msra.mxu0 0.0
      %1444 = vmatprep.subr.mxu0 0.0
      %1445 = vmatpush1.msra.mxu0 0.0
      %1446 = vmatprep.subr.mxu0 0.0
      %1447 = vmatpush1.msra.mxu0 0.0
      %1448 = vmatprep.subr.mxu0 0.0
      %1449 = vmatpush1.msra.mxu0 0.0
      %1450 = vmatprep.subr.mxu0 0.0
      %1451 = vmatpush1.msra.mxu0 0.0
      %1452 = vmatprep.subr.mxu0 0.0
      %1453 = vmatpush1.msra.mxu0 0.0
      %1454 = vmatprep.subr.mxu0 0.0
      %1455 = vmatpush1.msra.mxu0 0.0
      %1456 = vmatprep.subr.mxu0 0.0
      %1457 = vmatpush1.msra.mxu0 0.0
      %1458 = vmatprep.subr.mxu0 0.0
      %1459 = vmatpush1.msra.mxu0 0.0
      %1460 = vmatprep.subr.mxu0 0.0
      %1461 = vmatpush1.msra.mxu0 0.0
      %1462 = vmatprep.subr.mxu0 0.0
      %1463 = vmatpush1.msra.mxu0 0.0
      %1464 = vmatprep.subr.mxu0 0.0
      %1465 = vmatpush1.msra.mxu0 0.0
      %1466 = vmatprep.subr.mxu0 0.0
      %1467 = vmatpush1.msra.mxu0 0.0
      %1468 = vmatprep.subr.mxu0 0.0
      %1469 = vmatpush1.msra.mxu0 0.0
      %1470 = vmatprep.subr.mxu0 0.0
      %1471 = vmatpush1.msra.mxu0 0.0
      %1472 = vmatprep.subr.mxu0 0.0
      %1473 = vmatpush1.msra.mxu0 0.0
      %1474 = vmatprep.subr.mxu0 0.0
      %1475 = vmatpush1.msra.mxu0 0.0
      %1476 = vmatprep.subr.mxu0 0.0
      %1477 = vmatpush1.msra.mxu0 0.0
      %1478 = vmatprep.subr.mxu0 0.0
      %1479 = vmatpush1.msra.mxu0 0.0
      %1480 = vmatprep.subr.mxu0 0.0
      %1481 = vmatpush1.msra.mxu0 0.0
      %1482 = vmatprep.subr.mxu0 0.0
      %1483 = vmatpush1.msra.mxu0 0.0
      %1484 = vmatprep.subr.mxu0 0.0
      %1485 = vmatpush1.msra.mxu0 0.0
      %1486 = vmatprep.subr.mxu0 0.0
      %1487 = vmatpush1.msra.mxu0 0.0
      %1488 = vmatprep.subr.mxu0 0.0
      %1489 = vmatpush1.msra.mxu0 0.0
      %1490 = vmatprep.subr.mxu0 0.0
      %1491 = vmatpush1.msra.mxu0 0.0
      %1492 = vmatprep.subr.mxu0 0.0
      %1493 = vmatpush1.msra.mxu0 0.0
      %1494 = vmatprep.subr.mxu0 0.0
      %1495 = vmatpush1.msra.mxu0 0.0
      %1496 = vmatprep.mubr.f32.mxu0 0.0
      %1497 = vmatmul.mubr.f32.gmra.mrb[0].mxu0 %v1430
      %v1498 = vpop.f32.mrb[0].mxu0
      %v1499 = vadd.f32 0.0, %v1498
      %v1500 = vpop.f32.mrb[0].mxu0
      %1501 = vdwg.mxu0
      %v1503 = vsel %vm1282, %v1277, 0
      %1505 = vmatprep.subr.mxu0 0.0
      %1506 = vmatpush1.msra.mxu0 %v542
      %1507 = vmatprep.subr.mxu0 0.0
      %1508 = vmatpush1.msra.mxu0 %v543
      %1509 = vmatprep.subr.mxu0 0.0
      %1510 = vmatpush1.msra.mxu0 0.0
      %1511 = vmatprep.subr.mxu0 0.0
      %1512 = vmatpush1.msra.mxu0 0.0
      %1513 = vmatprep.subr.mxu0 0.0
      %1514 = vmatpush1.msra.mxu0 0.0
      %1515 = vmatprep.subr.mxu0 0.0
      %1516 = vmatpush1.msra.mxu0 0.0
      %1517 = vmatprep.subr.mxu0 0.0
      %1518 = vmatpush1.msra.mxu0 0.0
      %1519 = vmatprep.subr.mxu0 0.0
      %1520 = vmatpush1.msra.mxu0 0.0
      %1521 = vmatprep.subr.mxu0 0.0
      %1522 = vmatpush1.msra.mxu0 0.0
      %1523 = vmatprep.subr.mxu0 0.0
      %1524 = vmatpush1.msra.mxu0 0.0
      %1525 = vmatprep.subr.mxu0 0.0
      %1526 = vmatpush1.msra.mxu0 0.0
      %1527 = vmatprep.subr.mxu0 0.0
      %1528 = vmatpush1.msra.mxu0 0.0
      %1529 = vmatprep.subr.mxu0 0.0
      %1530 = vmatpush1.msra.mxu0 0.0
      %1531 = vmatprep.subr.mxu0 0.0
      %1532 = vmatpush1.msra.mxu0 0.0
      %1533 = vmatprep.subr.mxu0 0.0
      %1534 = vmatpush1.msra.mxu0 0.0
      %1535 = vmatprep.subr.mxu0 0.0
      %1536 = vmatpush1.msra.mxu0 0.0
      %1537 = vmatprep.subr.mxu0 0.0
      %1538 = vmatpush1.msra.mxu0 0.0
      %1539 = vmatprep.subr.mxu0 0.0
      %1540 = vmatpush1.msra.mxu0 0.0
      %1541 = vmatprep.subr.mxu0 0.0
      %1542 = vmatpush1.msra.mxu0 0.0
      %1543 = vmatprep.subr.mxu0 0.0
      %1544 = vmatpush1.msra.mxu0 0.0
      %1545 = vmatprep.subr.mxu0 0.0
      %1546 = vmatpush1.msra.mxu0 0.0
      %1547 = vmatprep.subr.mxu0 0.0
      %1548 = vmatpush1.msra.mxu0 0.0
      %1549 = vmatprep.subr.mxu0 0.0
      %1550 = vmatpush1.msra.mxu0 0.0
      %1551 = vmatprep.subr.mxu0 0.0
      %1552 = vmatpush1.msra.mxu0 0.0
      %1553 = vmatprep.subr.mxu0 0.0
      %1554 = vmatpush1.msra.mxu0 0.0
      %1555 = vmatprep.subr.mxu0 0.0
      %1556 = vmatpush1.msra.mxu0 0.0
      %1557 = vmatprep.subr.mxu0 0.0
      %1558 = vmatpush1.msra.mxu0 0.0
      %1559 = vmatprep.subr.mxu0 0.0
      %1560 = vmatpush1.msra.mxu0 0.0
      %1561 = vmatprep.subr.mxu0 0.0
      %1562 = vmatpush1.msra.mxu0 0.0
      %1563 = vmatprep.subr.mxu0 0.0
      %1564 = vmatpush1.msra.mxu0 0.0
      %1565 = vmatprep.subr.mxu0 0.0
      %1566 = vmatpush1.msra.mxu0 0.0
      %1567 = vmatprep.subr.mxu0 0.0
      %1568 = vmatpush1.msra.mxu0 0.0
      %1569 = vmatprep.mubr.f32.mxu0 0.0
      %1570 = vmatmul.mubr.f32.gmra.mrb[0].mxu0 %v1503
      %v1571 = vpop.f32.mrb[0].mxu0
      %v1572 = vadd.f32 0.0, %v1571
      %v1573 = vpop.f32.mrb[0].mxu0
      %1574 = vdwg.mxu0
      %v1576 = vsel %vm1282, %v1278, 0
      %1578 = vmatprep.subr.mxu0 0.0
      %1579 = vmatpush1.msra.mxu0 %v544
      %1580 = vmatprep.subr.mxu0 0.0
      %1581 = vmatpush1.msra.mxu0 %v545
      %1582 = vmatprep.subr.mxu0 0.0
      %1583 = vmatpush1.msra.mxu0 0.0
      %1584 = vmatprep.subr.mxu0 0.0
      %1585 = vmatpush1.msra.mxu0 0.0
      %1586 = vmatprep.subr.mxu0 0.0
      %1587 = vmatpush1.msra.mxu0 0.0
      %1588 = vmatprep.subr.mxu0 0.0
      %1589 = vmatpush1.msra.mxu0 0.0
      %1590 = vmatprep.subr.mxu0 0.0
      %1591 = vmatpush1.msra.mxu0 0.0
      %1592 = vmatprep.subr.mxu0 0.0
      %1593 = vmatpush1.msra.mxu0 0.0
      %1594 = vmatprep.subr.mxu0 0.0
      %1595 = vmatpush1.msra.mxu0 0.0
      %1596 = vmatprep.subr.mxu0 0.0
      %1597 = vmatpush1.msra.mxu0 0.0
      %1598 = vmatprep.subr.mxu0 0.0
      %1599 = vmatpush1.msra.mxu0 0.0
      %1600 = vmatprep.subr.mxu0 0.0
      %1601 = vmatpush1.msra.mxu0 0.0
      %1602 = vmatprep.subr.mxu0 0.0
      %1603 = vmatpush1.msra.mxu0 0.0
      %1604 = vmatprep.subr.mxu0 0.0
      %1605 = vmatpush1.msra.mxu0 0.0
      %1606 = vmatprep.subr.mxu0 0.0
      %1607 = vmatpush1.msra.mxu0 0.0
      %1608 = vmatprep.subr.mxu0 0.0
      %1609 = vmatpush1.msra.mxu0 0.0
      %1610 = vmatprep.subr.mxu0 0.0
      %1611 = vmatpush1.msra.mxu0 0.0
      %1612 = vmatprep.subr.mxu0 0.0
      %1613 = vmatpush1.msra.mxu0 0.0
      %1614 = vmatprep.subr.mxu0 0.0
      %1615 = vmatpush1.msra.mxu0 0.0
      %1616 = vmatprep.subr.mxu0 0.0
      %1617 = vmatpush1.msra.mxu0 0.0
      %1618 = vmatprep.subr.mxu0 0.0
      %1619 = vmatpush1.msra.mxu0 0.0
      %1620 = vmatprep.subr.mxu0 0.0
      %1621 = vmatpush1.msra.mxu0 0.0
      %1622 = vmatprep.subr.mxu0 0.0
      %1623 = vmatpush1.msra.mxu0 0.0
      %1624 = vmatprep.subr.mxu0 0.0
      %1625 = vmatpush1.msra.mxu0 0.0
      %1626 = vmatprep.subr.mxu0 0.0
      %1627 = vmatpush1.msra.mxu0 0.0
      %1628 = vmatprep.subr.mxu0 0.0
      %1629 = vmatpush1.msra.mxu0 0.0
      %1630 = vmatprep.subr.mxu0 0.0
      %1631 = vmatpush1.msra.mxu0 0.0
      %1632 = vmatprep.subr.mxu0 0.0
      %1633 = vmatpush1.msra.mxu0 0.0
      %1634 = vmatprep.subr.mxu0 0.0
      %1635 = vmatpush1.msra.mxu0 0.0
      %1636 = vmatprep.subr.mxu0 0.0
      %1637 = vmatpush1.msra.mxu0 0.0
      %1638 = vmatprep.subr.mxu0 0.0
      %1639 = vmatpush1.msra.mxu0 0.0
      %1640 = vmatprep.subr.mxu0 0.0
      %1641 = vmatpush1.msra.mxu0 0.0
      %1642 = vmatprep.mubr.f32.mxu0 0.0
      %1643 = vmatmul.mubr.f32.gmra.mrb[0].mxu0 %v1576
      %v1644 = vpop.f32.mrb[0].mxu0
      %v1645 = vadd.f32 0.0, %v1644
      %v1646 = vpop.f32.mrb[0].mxu0
      %1647 = vdwg.mxu0
      %v1649 = vsel %vm1282, %v1279, 0
      %1651 = vmatprep.subr.mxu0 0.0
      %1652 = vmatpush1.msra.mxu0 %v546
      %1653 = vmatprep.subr.mxu0 0.0
      %1654 = vmatpush1.msra.mxu0 %v547
      %1655 = vmatprep.subr.mxu0 0.0
      %1656 = vmatpush1.msra.mxu0 0.0
      %1657 = vmatprep.subr.mxu0 0.0
      %1658 = vmatpush1.msra.mxu0 0.0
      %1659 = vmatprep.subr.mxu0 0.0
      %1660 = vmatpush1.msra.mxu0 0.0
      %1661 = vmatprep.subr.mxu0 0.0
      %1662 = vmatpush1.msra.mxu0 0.0
      %1663 = vmatprep.subr.mxu0 0.0
      %1664 = vmatpush1.msra.mxu0 0.0
      %1665 = vmatprep.subr.mxu0 0.0
      %1666 = vmatpush1.msra.mxu0 0.0
      %1667 = vmatprep.subr.mxu0 0.0
      %1668 = vmatpush1.msra.mxu0 0.0
      %1669 = vmatprep.subr.mxu0 0.0
      %1670 = vmatpush1.msra.mxu0 0.0
      %1671 = vmatprep.subr.mxu0 0.0
      %1672 = vmatpush1.msra.mxu0 0.0
      %1673 = vmatprep.subr.mxu0 0.0
      %1674 = vmatpush1.msra.mxu0 0.0
      %1675 = vmatprep.subr.mxu0 0.0
      %1676 = vmatpush1.msra.mxu0 0.0
      %1677 = vmatprep.subr.mxu0 0.0
      %1678 = vmatpush1.msra.mxu0 0.0
      %1679 = vmatprep.subr.mxu0 0.0
      %1680 = vmatpush1.msra.mxu0 0.0
      %1681 = vmatprep.subr.mxu0 0.0
      %1682 = vmatpush1.msra.mxu0 0.0
      %1683 = vmatprep.subr.mxu0 0.0
      %1684 = vmatpush1.msra.mxu0 0.0
      %1685 = vmatprep.subr.mxu0 0.0
      %1686 = vmatpush1.msra.mxu0 0.0
      %1687 = vmatprep.subr.mxu0 0.0
      %1688 = vmatpush1.msra.mxu0 0.0
      %1689 = vmatprep.subr.mxu0 0.0
      %1690 = vmatpush1.msra.mxu0 0.0
      %1691 = vmatprep.subr.mxu0 0.0
      %1692 = vmatpush1.msra.mxu0 0.0
      %1693 = vmatprep.subr.mxu0 0.0
      %1694 = vmatpush1.msra.mxu0 0.0
      %1695 = vmatprep.subr.mxu0 0.0
      %1696 = vmatpush1.msra.mxu0 0.0
      %1697 = vmatprep.subr.mxu0 0.0
      %1698 = vmatpush1.msra.mxu0 0.0
      %1699 = vmatprep.subr.mxu0 0.0
      %1700 = vmatpush1.msra.mxu0 0.0
      %1701 = vmatprep.subr.mxu0 0.0
      %1702 = vmatpush1.msra.mxu0 0.0
      %1703 = vmatprep.subr.mxu0 0.0
      %1704 = vmatpush1.msra.mxu0 0.0
      %1705 = vmatprep.subr.mxu0 0.0
      %1706 = vmatpush1.msra.mxu0 0.0
      %1707 = vmatprep.subr.mxu0 0.0
      %1708 = vmatpush1.msra.mxu0 0.0
      %1709 = vmatprep.subr.mxu0 0.0
      %1710 = vmatpush1.msra.mxu0 0.0
      %1711 = vmatprep.subr.mxu0 0.0
      %1712 = vmatpush1.msra.mxu0 0.0
      %1713 = vmatprep.subr.mxu0 0.0
      %1714 = vmatpush1.msra.mxu0 0.0
      %1715 = vmatprep.mubr.f32.mxu0 0.0
      %1716 = vmatmul.mubr.f32.gmra.mrb[0].mxu0 %v1649
      %v1717 = vpop.f32.mrb[0].mxu0
      %v1718 = vadd.f32 0.0, %v1717
      %v1719 = vpop.f32.mrb[0].mxu0
      %1720 = vdwg.mxu0
      %v1722 = vsel %vm1282, %v1280, 0
      %1724 = vmatprep.subr.mxu0 0.0
      %1725 = vmatpush1.msra.mxu0 %v548
      %1726 = vmatprep.subr.mxu0 0.0
      %1727 = vmatpush1.msra.mxu0 %v549
      %1728 = vmatprep.subr.mxu0 0.0
      %1729 = vmatpush1.msra.mxu0 0.0
      %1730 = vmatprep.subr.mxu0 0.0
      %1731 = vmatpush1.msra.mxu0 0.0
      %1732 = vmatprep.subr.mxu0 0.0
      %1733 = vmatpush1.msra.mxu0 0.0
      %1734 = vmatprep.subr.mxu0 0.0
      %1735 = vmatpush1.msra.mxu0 0.0
      %1736 = vmatprep.subr.mxu0 0.0
      %1737 = vmatpush1.msra.mxu0 0.0
      %1738 = vmatprep.subr.mxu0 0.0
      %1739 = vmatpush1.msra.mxu0 0.0
      %1740 = vmatprep.subr.mxu0 0.0
      %1741 = vmatpush1.msra.mxu0 0.0
      %1742 = vmatprep.subr.mxu0 0.0
      %1743 = vmatpush1.msra.mxu0 0.0
      %1744 = vmatprep.subr.mxu0 0.0
      %1745 = vmatpush1.msra.mxu0 0.0
      %1746 = vmatprep.subr.mxu0 0.0
      %1747 = vmatpush1.msra.mxu0 0.0
      %1748 = vmatprep.subr.mxu0 0.0
      %1749 = vmatpush1.msra.mxu0 0.0
      %1750 = vmatprep.subr.mxu0 0.0
      %1751 = vmatpush1.msra.mxu0 0.0
      %1752 = vmatprep.subr.mxu0 0.0
      %1753 = vmatpush1.msra.mxu0 0.0
      %1754 = vmatprep.subr.mxu0 0.0
      %1755 = vmatpush1.msra.mxu0 0.0
      %1756 = vmatprep.subr.mxu0 0.0
      %1757 = vmatpush1.msra.mxu0 0.0
      %1758 = vmatprep.subr.mxu0 0.0
      %1759 = vmatpush1.msra.mxu0 0.0
      %1760 = vmatprep.subr.mxu0 0.0
      %1761 = vmatpush1.msra.mxu0 0.0
      %1762 = vmatprep.subr.mxu0 0.0
      %1763 = vmatpush1.msra.mxu0 0.0
      %1764 = vmatprep.subr.mxu0 0.0
      %1765 = vmatpush1.msra.mxu0 0.0
      %1766 = vmatprep.subr.mxu0 0.0
      %1767 = vmatpush1.msra.mxu0 0.0
      %1768 = vmatprep.subr.mxu0 0.0
      %1769 = vmatpush1.msra.mxu0 0.0
      %1770 = vmatprep.subr.mxu0 0.0
      %1771 = vmatpush1.msra.mxu0 0.0
      %1772 = vmatprep.subr.mxu0 0.0
      %1773 = vmatpush1.msra.mxu0 0.0
      %1774 = vmatprep.subr.mxu0 0.0
      %1775 = vmatpush1.msra.mxu0 0.0
      %1776 = vmatprep.subr.mxu0 0.0
      %1777 = vmatpush1.msra.mxu0 0.0
      %1778 = vmatprep.subr.mxu0 0.0
      %1779 = vmatpush1.msra.mxu0 0.0
      %1780 = vmatprep.subr.mxu0 0.0
      %1781 = vmatpush1.msra.mxu0 0.0
      %1782 = vmatprep.subr.mxu0 0.0
      %1783 = vmatpush1.msra.mxu0 0.0
      %1784 = vmatprep.subr.mxu0 0.0
      %1785 = vmatpush1.msra.mxu0 0.0
      %1786 = vmatprep.subr.mxu0 0.0
      %1787 = vmatpush1.msra.mxu0 0.0
      %1788 = vmatprep.mubr.f32.mxu0 0.0
      %1789 = vmatmul.mubr.f32.gmra.mrb[0].mxu0 %v1722
      %v1790 = vpop.f32.mrb[0].mxu0
      %v1791 = vadd.f32 0.0, %v1790
      %v1792 = vpop.f32.mrb[0].mxu0
      %1793 = vdwg.mxu0
      %v1795 = vsel %vm1282, %v1281, 0
      %1797 = vmatprep.subr.mxu0 0.0
      %1798 = vmatpush1.msra.mxu0 %v550
      %1799 = vmatprep.subr.mxu0 0.0
      %1800 = vmatpush1.msra.mxu0 %v551
      %1801 = vmatprep.subr.mxu0 0.0
      %1802 = vmatpush1.msra.mxu0 0.0
      %1803 = vmatprep.subr.mxu0 0.0
      %1804 = vmatpush1.msra.mxu0 0.0
      %1805 = vmatprep.subr.mxu0 0.0
      %1806 = vmatpush1.msra.mxu0 0.0
      %1807 = vmatprep.subr.mxu0 0.0
      %1808 = vmatpush1.msra.mxu0 0.0
      %1809 = vmatprep.subr.mxu0 0.0
      %1810 = vmatpush1.msra.mxu0 0.0
      %1811 = vmatprep.subr.mxu0 0.0
      %1812 = vmatpush1.msra.mxu0 0.0
      %1813 = vmatprep.subr.mxu0 0.0
      %1814 = vmatpush1.msra.mxu0 0.0
      %1815 = vmatprep.subr.mxu0 0.0
      %1816 = vmatpush1.msra.mxu0 0.0
      %1817 = vmatprep.subr.mxu0 0.0
      %1818 = vmatpush1.msra.mxu0 0.0
      %1819 = vmatprep.subr.mxu0 0.0
      %1820 = vmatpush1.msra.mxu0 0.0
      %1821 = vmatprep.subr.mxu0 0.0
      %1822 = vmatpush1.msra.mxu0 0.0
      %1823 = vmatprep.subr.mxu0 0.0
      %1824 = vmatpush1.msra.mxu0 0.0
      %1825 = vmatprep.subr.mxu0 0.0
      %1826 = vmatpush1.msra.mxu0 0.0
      %1827 = vmatprep.subr.mxu0 0.0
      %1828 = vmatpush1.msra.mxu0 0.0
      %1829 = vmatprep.subr.mxu0 0.0
      %1830 = vmatpush1.msra.mxu0 0.0
      %1831 = vmatprep.subr.mxu0 0.0
      %1832 = vmatpush1.msra.mxu0 0.0
      %1833 = vmatprep.subr.mxu0 0.0
      %1834 = vmatpush1.msra.mxu0 0.0
      %1835 = vmatprep.subr.mxu0 0.0
      %1836 = vmatpush1.msra.mxu0 0.0
      %1837 = vmatprep.subr.mxu0 0.0
      %1838 = vmatpush1.msra.mxu0 0.0
      %1839 = vmatprep.subr.mxu0 0.0
      %1840 = vmatpush1.msra.mxu0 0.0
      %1841 = vmatprep.subr.mxu0 0.0
      %1842 = vmatpush1.msra.mxu0 0.0
      %1843 = vmatprep.subr.mxu0 0.0
      %1844 = vmatpush1.msra.mxu0 0.0
      %1845 = vmatprep.subr.mxu0 0.0
      %1846 = vmatpush1.msra.mxu0 0.0
      %1847 = vmatprep.subr.mxu0 0.0
      %1848 = vmatpush1.msra.mxu0 0.0
      %1849 = vmatprep.subr.mxu0 0.0
      %1850 = vmatpush1.msra.mxu0 0.0
      %1851 = vmatprep.subr.mxu0 0.0
      %1852 = vmatpush1.msra.mxu0 0.0
      %1853 = vmatprep.subr.mxu0 0.0
      %1854 = vmatpush1.msra.mxu0 0.0
      %1855 = vmatprep.subr.mxu0 0.0
      %1856 = vmatpush1.msra.mxu0 0.0
      %1857 = vmatprep.subr.mxu0 0.0
      %1858 = vmatpush1.msra.mxu0 0.0
      %1859 = vmatprep.subr.mxu0 0.0
      %1860 = vmatpush1.msra.mxu0 0.0
      %1861 = vmatprep.mubr.f32.mxu0 0.0
      %1862 = vmatmul.mubr.f32.gmra.mrb[0].mxu0 %v1795
      %v1863 = vpop.f32.mrb[0].mxu0
      %v1864 = vadd.f32 0.0, %v1863
      %v1865 = vpop.f32.mrb[0].mxu0
      %1866 = vdwg.mxu0
      %vm1867 = vcmask 253952
      %1868 = vst.msk [vmem:[%s300] sm:$0x1] %vm1867, %v1353
      %1869 = vst.msk [vmem:[%s300 + $0x1] sm:$0x1] %vm1867, %v1426
      %1870 = vst.msk [vmem:[%s300 + $0x2] sm:$0x1] %vm1867, %v1499
      %1871 = vst.msk [vmem:[%s300 + $0x3] sm:$0x1] %vm1867, %v1572
      %1872 = vst.msk [vmem:[%s300 + $0x4] sm:$0x1] %vm1867, %v1645
      %1873 = vst.msk [vmem:[%s300 + $0x5] sm:$0x1] %vm1867, %v1718
      %1874 = vst.msk [vmem:[%s300 + $0x6] sm:$0x1] %vm1867, %v1791
      %1875 = vst.msk [vmem:[%s300 + $0x7] sm:$0x1] %vm1867, %v1864
      %s1876 = smul.u32 8, %s20
      %p1877 = scmp.lt.s32.totalorder %s19, 1
      %s1878 = scalar_select %p1877, %s19, 1
      %p1879 = scmp.lt.s32.totalorder %s1876, 7
      %s1880 = scalar_select %p1879, %s1876, 7
      %s1881 = smul.addr %s1878, 8
      %s1882 = sadd.s32 %s1880, %s1881
      %s1883 = scalar_lea.vmem %s4, %s1882
      // Predicated region
      $region37: #{pallas_forward.2} parent=35 // pred_check
        %p1884 = pneg %p155
      $region38: #{pallas_forward.2} parent=35 // pred_check_branch
        %1886 = sbr.rel (%p1884) target = $region40
      $region39: #{pallas_forward.2} parent=35 // pred_region
        %s1887 = smul.u32 8, %s20
      $region40: #{pallas_forward.2} parent=35 // pred_fallthru
        _
    $region36: #{pallas_forward.2} parent=5 // pred_fallthru
      _
    %p1888 = scmp.le.s32.totalorder 2, %s10
    // Predicated region
    $region41: #{pallas_forward.2} parent=5 // pred_check
      %p1889 = pneg %p1888
    $region42: #{pallas_forward.2} parent=5 // pred_check_branch
      %1891 = sbr.rel (%p1889) target = $region44
    $region43: #{pallas_forward.2} parent=5 // pred_region
      %s1892 = ssub.s32 %s10, 2
      // Predicated region
      $region45: #{pallas_forward.2} parent=43 // pred_check
        %p1893 = pneg %p161
      $region46: #{pallas_forward.2} parent=43 // pred_check_branch
        %1895 = sbr.rel (%p1893) target = $region48
      $region47: #{pallas_forward.2} parent=43 // pred_region
        %s1896 = smul.u32 8, %s22
        %p1897 = scmp.lt.s32.totalorder %s21, 1
        %s1898 = scalar_select %p1897, %s21, 1
        %p1899 = scmp.lt.s32.totalorder %s1896, 7
        %s1900 = scalar_select %p1899, %s1896, 7
        %s1901 = smul.addr %s1898, 8
        %s1902 = sadd.s32 %s1900, %s1901
        %s1903 = scalar_lea.vmem %s4, %s1902
      $region48: #{pallas_forward.2} parent=43 // pred_fallthru
        _
    $region44: #{pallas_forward.2} parent=5 // pred_fallthru
      _
  $region6: #{pallas_forward.2} parent=0 // loop_footer
    %s14 = sadd.s32 1, %s10
  $region7: #{pallas_forward.2} parent=0 // loop_footer_branch
    %9 = sbr.rel target = $region3
  $region8: #{pallas_forward.2} parent=0 // loop_exit
    _

</llo_original>
